<compile_context>
chip_gen: v6e
topology: v6e:2x2x1
jax: 0.10.0
libtpu: 0.0.40
codegen_flags: <defaults>
</compile_context>

<pallas_src>
import numpy as np
import jax
import jax.numpy as jnp
from jax.experimental import pallas as pl
from jax.experimental.pallas import tpu as pltpu

# ---- model hyperparameters (from spike_BCRNet_S / DSCONV2) ----
T = 10
B = 2
C_IN, L_IN = 2, 190
C1, K1, STRIDE1, PAD1 = 8, 7, 3, 3
L1 = (L_IN + 2 * PAD1 - K1) // STRIDE1 + 1       # 64
C2, K2, STRIDE2, PAD2 = 4, 5, 2, 2
L2 = (L1 + 2 * PAD2 - K2) // STRIDE2 + 1         # 32
F1 = L1 * C1                                      # 512
F2 = L2 * C2                                      # 128
NUM_CLASSES = 15
TAU = 2.0
V_TH = 0.5
BN_EPS = 1e-5

# ---- TPU-friendly padded sizes ----
B_PAD = 8                                         # full sublane tile
K1_PAD = 384                                      # 380 -> 3 * 128 lanes
BIAS_COL = C_IN * L_IN                            # 380: ones column carries Sh1
HEAD_PAD = 128                                    # 15  -> lane-dense head


def bcrnet_kernel(x_ref, m1_ref, m2_ref, sh2_ref, wh_ref, bh_ref,
                  out_ref, h1_ref, s1_ref, s2_ref):
    """Fused forward of spike_BCRNet_S (layer-by-layer over the T recurrence).

    x_ref  : (T*8, 384) bf16  padded input; column 380 holds 1.0 (bias driver)
    m1_ref : (384, 512) bf16  conv1 as matmul; BN1 scale, 1/tau, Sh1 folded in
    m2_ref : (512, 128) bf16  conv2 as matmul; BN2 scale & 1/tau folded in
    sh2_ref: (1, 128)   f32   BN2 shift + conv2 bias, x 1/tau
    wh_ref : (128, 128) bf16  head weight (channels-last, lane padded), x 1/tau
    bh_ref : (1, 128)   f32   head bias (lane padded), x 1/tau
    out_ref: (8, 128)   f32   mean over T of final spikes (padded)
    h1_ref : (T*8, 512) f32   scratch: hoisted conv1+BN1 output
    s1_ref : (T*8, 512) f32   scratch: LIF1 spikes
    s2_ref : (T*8, 128) f32   scratch: LIF2 spikes
    """
    tb = x_ref.shape[0]
    t_steps = tb // B_PAD                          # static Python int
    decay = 1.0 - 1.0 / TAU                        # membrane leak (= 0.5)

    # ---- stage 1: conv1 + BN1 + bias, hoisted: ONE batched matmul ----
    h1_ref[...] = jnp.dot(x_ref[...], m1_ref[...],
                          preferred_element_type=jnp.float32)

    # ---- stage 2: LIF1 — pure VPU scan over T, fully unrolled ----
    v1 = jnp.zeros((B_PAD, F1), jnp.float32)
    for t in range(t_steps):
        v1 = v1 * decay + h1_ref[pl.ds(t * B_PAD, B_PAD), :]
        f = v1 >= V_TH
        s1_ref[pl.ds(t * B_PAD, B_PAD), :] = jnp.where(f, 1.0, 0.0)
        v1 = jnp.where(f, 0.0, v1)

    # ---- stage 3: conv2 + BN2 as ONE batched matmul over all T ----
    h2 = jnp.dot(s1_ref[...].astype(jnp.bfloat16), m2_ref[...],
                 preferred_element_type=jnp.float32) + sh2_ref[...]

    # ---- stage 4: LIF2 scan (VPU only, unrolled) ----
    v2 = jnp.zeros((B_PAD, F2), jnp.float32)
    for t in range(t_steps):
        v2 = v2 * decay + h2[t * B_PAD:(t + 1) * B_PAD, :]
        f = v2 >= V_TH
        s2_ref[pl.ds(t * B_PAD, B_PAD), :] = jnp.where(f, 1.0, 0.0)
        v2 = jnp.where(f, 0.0, v2)

    # ---- stage 5: head Linear as ONE batched matmul over all T ----
    h3 = jnp.dot(s2_ref[...].astype(jnp.bfloat16), wh_ref[...],
                 preferred_element_type=jnp.float32) + bh_ref[...]

    # ---- stage 6: LIF3 scan + mean over T ----
    v3 = jnp.zeros((B_PAD, HEAD_PAD), jnp.float32)
    acc = jnp.zeros((B_PAD, HEAD_PAD), jnp.float32)
    for t in range(t_steps):
        v3 = v3 * decay + h3[t * B_PAD:(t + 1) * B_PAD, :]
        f = v3 >= V_TH
        acc = acc + jnp.where(f, 1.0, 0.0)
        v3 = jnp.where(f, 0.0, v3)

    out_ref[...] = acc * (1.0 / t_steps)           # x.mean(0)


def build_params(key):
    """Deterministic synthetic parameters (trunc_normal(std=0.02) ~ normal)."""
    ks = jax.random.split(key, 8)
    std = 0.02
    w1 = np.asarray(jax.random.normal(ks[0], (C1, C_IN, K1)) * std, np.float32)
    b1 = np.asarray(jax.random.normal(ks[1], (C1,)) * std, np.float32)
    w2 = np.asarray(jax.random.normal(ks[2], (C2, C1, K2)) * std, np.float32)
    b2 = np.asarray(jax.random.normal(ks[3], (C2,)) * std, np.float32)
    wh = np.asarray(jax.random.normal(ks[4], (NUM_CLASSES, F2)) * std, np.float32)
    bh = np.zeros((NUM_CLASSES,), np.float32)       # Linear bias init to 0

    # BatchNorm (inference) parameters, deterministic & nontrivial
    g1 = 1.0 + 0.1 * np.asarray(jax.random.normal(ks[5], (C1,)), np.float32)
    be1 = 0.05 * np.arange(C1, dtype=np.float32)
    rm1 = 0.01 * np.arange(C1, dtype=np.float32)
    rv1 = 1.0 + 0.1 * np.abs(np.asarray(jax.random.normal(ks[6], (C1,)), np.float32))
    g2 = 1.0 + 0.1 * np.asarray(jax.random.normal(ks[7], (C2,)), np.float32)
    be2 = 0.05 * np.arange(C2, dtype=np.float32)
    rm2 = 0.01 * np.arange(C2, dtype=np.float32)
    rv2 = np.ones((C2,), np.float32)

    inv_tau = np.float32(1.0 / TAU)

    # ---- conv1 as dense matmul: in f = ci*190 + l, out g = j*8 + co ----
    M1 = np.zeros((C_IN * L_IN, F1), np.float32)
    for j in range(L1):
        for kk in range(K1):
            l = STRIDE1 * j - PAD1 + kk
            if 0 <= l < L_IN:
                for ci in range(C_IN):
                    M1[ci * L_IN + l, j * C1:(j + 1) * C1] = w1[:, ci, kk]
    a1 = g1 / np.sqrt(rv1 + BN_EPS)
    sh1 = be1 - a1 * rm1 + a1 * b1                  # conv bias folded into BN shift
    M1 = M1 * (np.tile(a1, L1) * inv_tau)[None, :]  # fold BN scale & 1/tau into cols
    M1p = np.zeros((K1_PAD, F1), np.float32)        # pad contraction 380 -> 384
    M1p[:C_IN * L_IN] = M1
    M1p[BIAS_COL, :] = np.tile(sh1, L1) * inv_tau   # bias row driven by ones column

    # ---- conv2 as dense matmul: in g = l*8 + ci, out g = j*4 + co ----
    M2 = np.zeros((F1, F2), np.float32)
    for j in range(L2):
        for kk in range(K2):
            l = STRIDE2 * j - PAD2 + kk
            if 0 <= l < L1:
                for ci in range(C1):
                    M2[l * C1 + ci, j * C2:(j + 1) * C2] = w2[:, ci, kk]
    a2 = g2 / np.sqrt(rv2 + BN_EPS)
    sh2 = be2 - a2 * rm2 + a2 * b2
    M2 = M2 * (np.tile(a2, L2) * inv_tau)[None, :]
    Sh2 = (np.tile(sh2, L2) * inv_tau)[None, :]     # (1, 128)

    # ---- head: PyTorch flatten(2,3) order (c*32+l) -> channels-last (l*4+c),
    #      1/tau folded, lane-padded 15 -> 128 ----
    Wh = np.zeros((F2, HEAD_PAD), np.float32)
    for g in range(F2):
        c, l = g % C2, g // C2
        Wh[g, :NUM_CLASSES] = wh[:, c * L2 + l] * inv_tau
    Bh = np.zeros((1, HEAD_PAD), np.float32)
    Bh[0, :NUM_CLASSES] = bh * inv_tau

    return (jnp.asarray(M1p, jnp.bfloat16), jnp.asarray(M2, jnp.bfloat16),
            jnp.asarray(Sh2, jnp.float32), jnp.asarray(Wh, jnp.bfloat16),
            jnp.asarray(Bh, jnp.float32))


@jax.jit
def spike_bcrnet_s(x, params):
    M1, M2, Sh2, Wh, Bh = params
    t_steps, bn, f_in = x.shape
    # batch-pad to a full sublane tile, zero-pad features 380 -> 384, cast bf16;
    # the padded column 380 is set to 1.0 so row 380 of M1 supplies Sh1 (bias).
    xw = jnp.pad(x, ((0, 0), (0, B_PAD - bn), (0, K1_PAD - f_in)))
    xw = xw.at[:, :, BIAS_COL].set(1.0)
    x_mat = xw.reshape(t_steps * B_PAD, K1_PAD).astype(jnp.bfloat16)

    vspec = pl.BlockSpec(memory_space=pltpu.MemorySpace.VMEM)
    out = pl.pallas_call(
        bcrnet_kernel,
        out_shape=jax.ShapeDtypeStruct((B_PAD, HEAD_PAD), jnp.float32),
        in_specs=[vspec] * 6,
        out_specs=vspec,
        scratch_shapes=[
            pltpu.VMEM((t_steps * B_PAD, F1), jnp.float32),   # h1 (conv1+BN1)
            pltpu.VMEM((t_steps * B_PAD, F1), jnp.float32),   # s1 spikes
            pltpu.VMEM((t_steps * B_PAD, F2), jnp.float32),   # s2 spikes
        ],
    )(x_mat, M1, M2, Sh2, Wh, Bh)
    return out[:bn, :NUM_CLASSES]


if __name__ == "__main__":
    key = jax.random.PRNGKey(0)
    kx, kp = jax.random.split(key)
    # input consistent with forward: x.reshape(T, B, 2, 190)  =>  feature dim 380
    x = 4.0 * jax.random.normal(kx, (T, B, C_IN * L_IN), jnp.float32)
    params = build_params(kp)

    out = spike_bcrnet_s(x, params)
    jax.block_until_ready(out)
    assert out.shape == (B, NUM_CLASSES) and out.dtype == jnp.float32
    print("KERNEL_OK")
</pallas_src>

<mosaic_0001>
module attributes {stable_mosaic.version = 11 : i64} {
  func.func @bcrnet_kernel(%arg0: memref<80x384xbf16, #tpu.memory_space<vmem>>, %arg1: memref<384x512xbf16, #tpu.memory_space<vmem>>, %arg2: memref<512x128xbf16, #tpu.memory_space<vmem>>, %arg3: memref<1x128xf32, #tpu.memory_space<vmem>>, %arg4: memref<128x128xbf16, #tpu.memory_space<vmem>>, %arg5: memref<1x128xf32, #tpu.memory_space<vmem>>, %arg6: memref<8x128xf32, #tpu.memory_space<vmem>>, %arg7: memref<80x512xf32, #tpu.memory_space<vmem>>, %arg8: memref<80x512xf32, #tpu.memory_space<vmem>>, %arg9: memref<80x128xf32, #tpu.memory_space<vmem>>) attributes {dimension_semantics = [], scalar_prefetch = 0 : i64, scratch_operands = 3 : i64, tpu.core_type = #tpu.core_type<tc>} {
    %c0 = arith.constant 0 : index
    %c0_0 = arith.constant 0 : index
    %0 = vector.load %arg0[%c0, %c0_0] : memref<80x384xbf16, #tpu.memory_space<vmem>>, vector<80x384xbf16>
    %c0_1 = arith.constant 0 : index
    %c0_2 = arith.constant 0 : index
    %1 = vector.load %arg1[%c0_1, %c0_2] : memref<384x512xbf16, #tpu.memory_space<vmem>>, vector<384x512xbf16>
    %cst = arith.constant dense<0.000000e+00> : vector<80x512xf32>
    %2 = tpu.matmul %0, %1, %cst {dimension_numbers = #tpu.dot_dimension_numbers<[1], [0], [0], [1], [0, 0, 1, 1], [], []>} : vector<80x384xbf16>, vector<384x512xbf16>, vector<80x512xf32> -> vector<80x512xf32>
    %c0_3 = arith.constant 0 : index
    %c0_4 = arith.constant 0 : index
    %3 = vector.load %arg7[%c0_3, %c0_4] : memref<80x512xf32, #tpu.memory_space<vmem>>, vector<80x512xf32>
    tpu.vector_store %arg7[%c0_3, %c0_4], %2 {strides = array<i32>} : memref<80x512xf32, #tpu.memory_space<vmem>>, vector<80x512xf32>,
    %cst_5 = arith.constant 0.000000e+00 : f32
    %4 = vector.broadcast %cst_5 : f32 to vector<8x512xf32>
    %cst_6 = arith.constant 5.000000e-01 : f32
    %5 = vector.broadcast %cst_6 : f32 to vector<8x512xf32>
    %6 = arith.mulf %4, %5 : vector<8x512xf32>
    %c0_7 = arith.constant 0 : index
    %c0_8 = arith.constant 0 : index
    %7 = vector.load %arg7[%c0_7, %c0_8] : memref<80x512xf32, #tpu.memory_space<vmem>>, vector<8x512xf32>
    %8 = arith.addf %6, %7 : vector<8x512xf32>
    %cst_9 = arith.constant 5.000000e-01 : f32
    %9 = vector.broadcast %cst_9 : f32 to vector<8x512xf32>
    %10 = arith.cmpf oge, %8, %9 : vector<8x512xf32>
    %cst_10 = arith.constant 1.000000e+00 : f32
    %cst_11 = arith.constant 0.000000e+00 : f32
    %11 = vector.broadcast %cst_10 : f32 to vector<8x512xf32>
    %12 = vector.broadcast %cst_11 : f32 to vector<8x512xf32>
    %13 = arith.select %10, %11, %12 : vector<8x512xi1>, vector<8x512xf32>
    %c0_12 = arith.constant 0 : index
    %c0_13 = arith.constant 0 : index
    %14 = vector.load %arg8[%c0_12, %c0_13] : memref<80x512xf32, #tpu.memory_space<vmem>>, vector<8x512xf32>
    tpu.vector_store %arg8[%c0_12, %c0_13], %13 {strides = array<i32>} : memref<80x512xf32, #tpu.memory_space<vmem>>, vector<8x512xf32>,
    %cst_14 = arith.constant 0.000000e+00 : f32
    %15 = vector.broadcast %cst_14 : f32 to vector<8x512xf32>
    %16 = arith.select %10, %15, %8 : vector<8x512xi1>, vector<8x512xf32>
    %cst_15 = arith.constant 5.000000e-01 : f32
    %17 = vector.broadcast %cst_15 : f32 to vector<8x512xf32>
    %18 = arith.mulf %16, %17 : vector<8x512xf32>
    %c8 = arith.constant 8 : index
    %c0_16 = arith.constant 0 : index
    %19 = vector.load %arg7[%c8, %c0_16] : memref<80x512xf32, #tpu.memory_space<vmem>>, vector<8x512xf32>
    %20 = arith.addf %18, %19 : vector<8x512xf32>
    %cst_17 = arith.constant 5.000000e-01 : f32
    %21 = vector.broadcast %cst_17 : f32 to vector<8x512xf32>
    %22 = arith.cmpf oge, %20, %21 : vector<8x512xf32>
    %cst_18 = arith.constant 1.000000e+00 : f32
    %cst_19 = arith.constant 0.000000e+00 : f32
    %23 = vector.broadcast %cst_18 : f32 to vector<8x512xf32>
    %24 = vector.broadcast %cst_19 : f32 to vector<8x512xf32>
    %25 = arith.select %22, %23, %24 : vector<8x512xi1>, vector<8x512xf32>
    %c8_20 = arith.constant 8 : index
    %c0_21 = arith.constant 0 : index
    %26 = vector.load %arg8[%c8_20, %c0_21] : memref<80x512xf32, #tpu.memory_space<vmem>>, vector<8x512xf32>
    tpu.vector_store %arg8[%c8_20, %c0_21], %25 {strides = array<i32>} : memref<80x512xf32, #tpu.memory_space<vmem>>, vector<8x512xf32>,
    %cst_22 = arith.constant 0.000000e+00 : f32
    %27 = vector.broadcast %cst_22 : f32 to vector<8x512xf32>
    %28 = arith.select %22, %27, %20 : vector<8x512xi1>, vector<8x512xf32>
    %cst_23 = arith.constant 5.000000e-01 : f32
    %29 = vector.broadcast %cst_23 : f32 to vector<8x512xf32>
    %30 = arith.mulf %28, %29 : vector<8x512xf32>
    %c16 = arith.constant 16 : index
    %c0_24 = arith.constant 0 : index
    %31 = vector.load %arg7[%c16, %c0_24] : memref<80x512xf32, #tpu.memory_space<vmem>>, vector<8x512xf32>
    %32 = arith.addf %30, %31 : vector<8x512xf32>
    %cst_25 = arith.constant 5.000000e-01 : f32
    %33 = vector.broadcast %cst_25 : f32 to vector<8x512xf32>
    %34 = arith.cmpf oge, %32, %33 : vector<8x512xf32>
    %cst_26 = arith.constant 1.000000e+00 : f32
    %cst_27 = arith.constant 0.000000e+00 : f32
    %35 = vector.broadcast %cst_26 : f32 to vector<8x512xf32>
    %36 = vector.broadcast %cst_27 : f32 to vector<8x512xf32>
    %37 = arith.select %34, %35, %36 : vector<8x512xi1>, vector<8x512xf32>
    %c16_28 = arith.constant 16 : index
    %c0_29 = arith.constant 0 : index
    %38 = vector.load %arg8[%c16_28, %c0_29] : memref<80x512xf32, #tpu.memory_space<vmem>>, vector<8x512xf32>
    tpu.vector_store %arg8[%c16_28, %c0_29], %37 {strides = array<i32>} : memref<80x512xf32, #tpu.memory_space<vmem>>, vector<8x512xf32>,
    %cst_30 = arith.constant 0.000000e+00 : f32
    %39 = vector.broadcast %cst_30 : f32 to vector<8x512xf32>
    %40 = arith.select %34, %39, %32 : vector<8x512xi1>, vector<8x512xf32>
    %cst_31 = arith.constant 5.000000e-01 : f32
    %41 = vector.broadcast %cst_31 : f32 to vector<8x512xf32>
    %42 = arith.mulf %40, %41 : vector<8x512xf32>
    %c24 = arith.constant 24 : index
    %c0_32 = arith.constant 0 : index
    %43 = vector.load %arg7[%c24, %c0_32] : memref<80x512xf32, #tpu.memory_space<vmem>>, vector<8x512xf32>
    %44 = arith.addf %42, %43 : vector<8x512xf32>
    %cst_33 = arith.constant 5.000000e-01 : f32
    %45 = vector.broadcast %cst_33 : f32 to vector<8x512xf32>
    %46 = arith.cmpf oge, %44, %45 : vector<8x512xf32>
    %cst_34 = arith.constant 1.000000e+00 : f32
    %cst_35 = arith.constant 0.000000e+00 : f32
    %47 = vector.broadcast %cst_34 : f32 to vector<8x512xf32>
    %48 = vector.broadcast %cst_35 : f32 to vector<8x512xf32>
    %49 = arith.select %46, %47, %48 : vector<8x512xi1>, vector<8x512xf32>
    %c24_36 = arith.constant 24 : index
    %c0_37 = arith.constant 0 : index
    %50 = vector.load %arg8[%c24_36, %c0_37] : memref<80x512xf32, #tpu.memory_space<vmem>>, vector<8x512xf32>
    tpu.vector_store %arg8[%c24_36, %c0_37], %49 {strides = array<i32>} : memref<80x512xf32, #tpu.memory_space<vmem>>, vector<8x512xf32>,
    %cst_38 = arith.constant 0.000000e+00 : f32
    %51 = vector.broadcast %cst_38 : f32 to vector<8x512xf32>
    %52 = arith.select %46, %51, %44 : vector<8x512xi1>, vector<8x512xf32>
    %cst_39 = arith.constant 5.000000e-01 : f32
    %53 = vector.broadcast %cst_39 : f32 to vector<8x512xf32>
    %54 = arith.mulf %52, %53 : vector<8x512xf32>
    %c32 = arith.constant 32 : index
    %c0_40 = arith.constant 0 : index
    %55 = vector.load %arg7[%c32, %c0_40] : memref<80x512xf32, #tpu.memory_space<vmem>>, vector<8x512xf32>
    %56 = arith.addf %54, %55 : vector<8x512xf32>
    %cst_41 = arith.constant 5.000000e-01 : f32
    %57 = vector.broadcast %cst_41 : f32 to vector<8x512xf32>
    %58 = arith.cmpf oge, %56, %57 : vector<8x512xf32>
    %cst_42 = arith.constant 1.000000e+00 : f32
    %cst_43 = arith.constant 0.000000e+00 : f32
    %59 = vector.broadcast %cst_42 : f32 to vector<8x512xf32>
    %60 = vector.broadcast %cst_43 : f32 to vector<8x512xf32>
    %61 = arith.select %58, %59, %60 : vector<8x512xi1>, vector<8x512xf32>
    %c32_44 = arith.constant 32 : index
    %c0_45 = arith.constant 0 : index
    %62 = vector.load %arg8[%c32_44, %c0_45] : memref<80x512xf32, #tpu.memory_space<vmem>>, vector<8x512xf32>
    tpu.vector_store %arg8[%c32_44, %c0_45], %61 {strides = array<i32>} : memref<80x512xf32, #tpu.memory_space<vmem>>, vector<8x512xf32>,
    %cst_46 = arith.constant 0.000000e+00 : f32
    %63 = vector.broadcast %cst_46 : f32 to vector<8x512xf32>
    %64 = arith.select %58, %63, %56 : vector<8x512xi1>, vector<8x512xf32>
    %cst_47 = arith.constant 5.000000e-01 : f32
    %65 = vector.broadcast %cst_47 : f32 to vector<8x512xf32>
    %66 = arith.mulf %64, %65 : vector<8x512xf32>
    %c40 = arith.constant 40 : index
    %c0_48 = arith.constant 0 : index
    %67 = vector.load %arg7[%c40, %c0_48] : memref<80x512xf32, #tpu.memory_space<vmem>>, vector<8x512xf32>
    %68 = arith.addf %66, %67 : vector<8x512xf32>
    %cst_49 = arith.constant 5.000000e-01 : f32
    %69 = vector.broadcast %cst_49 : f32 to vector<8x512xf32>
    %70 = arith.cmpf oge, %68, %69 : vector<8x512xf32>
    %cst_50 = arith.constant 1.000000e+00 : f32
    %cst_51 = arith.constant 0.000000e+00 : f32
    %71 = vector.broadcast %cst_50 : f32 to vector<8x512xf32>
    %72 = vector.broadcast %cst_51 : f32 to vector<8x512xf32>
    %73 = arith.select %70, %71, %72 : vector<8x512xi1>, vector<8x512xf32>
    %c40_52 = arith.constant 40 : index
    %c0_53 = arith.constant 0 : index
    %74 = vector.load %arg8[%c40_52, %c0_53] : memref<80x512xf32, #tpu.memory_space<vmem>>, vector<8x512xf32>
    tpu.vector_store %arg8[%c40_52, %c0_53], %73 {strides = array<i32>} : memref<80x512xf32, #tpu.memory_space<vmem>>, vector<8x512xf32>,
    %cst_54 = arith.constant 0.000000e+00 : f32
    %75 = vector.broadcast %cst_54 : f32 to vector<8x512xf32>
    %76 = arith.select %70, %75, %68 : vector<8x512xi1>, vector<8x512xf32>
    %cst_55 = arith.constant 5.000000e-01 : f32
    %77 = vector.broadcast %cst_55 : f32 to vector<8x512xf32>
    %78 = arith.mulf %76, %77 : vector<8x512xf32>
    %c48 = arith.constant 48 : index
    %c0_56 = arith.constant 0 : index
    %79 = vector.load %arg7[%c48, %c0_56] : memref<80x512xf32, #tpu.memory_space<vmem>>, vector<8x512xf32>
    %80 = arith.addf %78, %79 : vector<8x512xf32>
    %cst_57 = arith.constant 5.000000e-01 : f32
    %81 = vector.broadcast %cst_57 : f32 to vector<8x512xf32>
    %82 = arith.cmpf oge, %80, %81 : vector<8x512xf32>
    %cst_58 = arith.constant 1.000000e+00 : f32
    %cst_59 = arith.constant 0.000000e+00 : f32
    %83 = vector.broadcast %cst_58 : f32 to vector<8x512xf32>
    %84 = vector.broadcast %cst_59 : f32 to vector<8x512xf32>
    %85 = arith.select %82, %83, %84 : vector<8x512xi1>, vector<8x512xf32>
    %c48_60 = arith.constant 48 : index
    %c0_61 = arith.constant 0 : index
    %86 = vector.load %arg8[%c48_60, %c0_61] : memref<80x512xf32, #tpu.memory_space<vmem>>, vector<8x512xf32>
    tpu.vector_store %arg8[%c48_60, %c0_61], %85 {strides = array<i32>} : memref<80x512xf32, #tpu.memory_space<vmem>>, vector<8x512xf32>,
    %cst_62 = arith.constant 0.000000e+00 : f32
    %87 = vector.broadcast %cst_62 : f32 to vector<8x512xf32>
    %88 = arith.select %82, %87, %80 : vector<8x512xi1>, vector<8x512xf32>
    %cst_63 = arith.constant 5.000000e-01 : f32
    %89 = vector.broadcast %cst_63 : f32 to vector<8x512xf32>
    %90 = arith.mulf %88, %89 : vector<8x512xf32>
    %c56 = arith.constant 56 : index
    %c0_64 = arith.constant 0 : index
    %91 = vector.load %arg7[%c56, %c0_64] : memref<80x512xf32, #tpu.memory_space<vmem>>, vector<8x512xf32>
    %92 = arith.addf %90, %91 : vector<8x512xf32>
    %cst_65 = arith.constant 5.000000e-01 : f32
    %93 = vector.broadcast %cst_65 : f32 to vector<8x512xf32>
    %94 = arith.cmpf oge, %92, %93 : vector<8x512xf32>
    %cst_66 = arith.constant 1.000000e+00 : f32
    %cst_67 = arith.constant 0.000000e+00 : f32
    %95 = vector.broadcast %cst_66 : f32 to vector<8x512xf32>
    %96 = vector.broadcast %cst_67 : f32 to vector<8x512xf32>
    %97 = arith.select %94, %95, %96 : vector<8x512xi1>, vector<8x512xf32>
    %c56_68 = arith.constant 56 : index
    %c0_69 = arith.constant 0 : index
    %98 = vector.load %arg8[%c56_68, %c0_69] : memref<80x512xf32, #tpu.memory_space<vmem>>, vector<8x512xf32>
    tpu.vector_store %arg8[%c56_68, %c0_69], %97 {strides = array<i32>} : memref<80x512xf32, #tpu.memory_space<vmem>>, vector<8x512xf32>,
    %cst_70 = arith.constant 0.000000e+00 : f32
    %99 = vector.broadcast %cst_70 : f32 to vector<8x512xf32>
    %100 = arith.select %94, %99, %92 : vector<8x512xi1>, vector<8x512xf32>
    %cst_71 = arith.constant 5.000000e-01 : f32
    %101 = vector.broadcast %cst_71 : f32 to vector<8x512xf32>
    %102 = arith.mulf %100, %101 : vector<8x512xf32>
    %c64 = arith.constant 64 : index
    %c0_72 = arith.constant 0 : index
    %103 = vector.load %arg7[%c64, %c0_72] : memref<80x512xf32, #tpu.memory_space<vmem>>, vector<8x512xf32>
    %104 = arith.addf %102, %103 : vector<8x512xf32>
    %cst_73 = arith.constant 5.000000e-01 : f32
    %105 = vector.broadcast %cst_73 : f32 to vector<8x512xf32>
    %106 = arith.cmpf oge, %104, %105 : vector<8x512xf32>
    %cst_74 = arith.constant 1.000000e+00 : f32
    %cst_75 = arith.constant 0.000000e+00 : f32
    %107 = vector.broadcast %cst_74 : f32 to vector<8x512xf32>
    %108 = vector.broadcast %cst_75 : f32 to vector<8x512xf32>
    %109 = arith.select %106, %107, %108 : vector<8x512xi1>, vector<8x512xf32>
    %c64_76 = arith.constant 64 : index
    %c0_77 = arith.constant 0 : index
    %110 = vector.load %arg8[%c64_76, %c0_77] : memref<80x512xf32, #tpu.memory_space<vmem>>, vector<8x512xf32>
    tpu.vector_store %arg8[%c64_76, %c0_77], %109 {strides = array<i32>} : memref<80x512xf32, #tpu.memory_space<vmem>>, vector<8x512xf32>,
    %cst_78 = arith.constant 0.000000e+00 : f32
    %111 = vector.broadcast %cst_78 : f32 to vector<8x512xf32>
    %112 = arith.select %106, %111, %104 : vector<8x512xi1>, vector<8x512xf32>
    %cst_79 = arith.constant 5.000000e-01 : f32
    %113 = vector.broadcast %cst_79 : f32 to vector<8x512xf32>
    %114 = arith.mulf %112, %113 : vector<8x512xf32>
    %c72 = arith.constant 72 : index
    %c0_80 = arith.constant 0 : index
    %115 = vector.load %arg7[%c72, %c0_80] : memref<80x512xf32, #tpu.memory_space<vmem>>, vector<8x512xf32>
    %116 = arith.addf %114, %115 : vector<8x512xf32>
    %cst_81 = arith.constant 5.000000e-01 : f32
    %117 = vector.broadcast %cst_81 : f32 to vector<8x512xf32>
    %118 = arith.cmpf oge, %116, %117 : vector<8x512xf32>
    %cst_82 = arith.constant 1.000000e+00 : f32
    %cst_83 = arith.constant 0.000000e+00 : f32
    %119 = vector.broadcast %cst_82 : f32 to vector<8x512xf32>
    %120 = vector.broadcast %cst_83 : f32 to vector<8x512xf32>
    %121 = arith.select %118, %119, %120 : vector<8x512xi1>, vector<8x512xf32>
    %c72_84 = arith.constant 72 : index
    %c0_85 = arith.constant 0 : index
    %122 = vector.load %arg8[%c72_84, %c0_85] : memref<80x512xf32, #tpu.memory_space<vmem>>, vector<8x512xf32>
    tpu.vector_store %arg8[%c72_84, %c0_85], %121 {strides = array<i32>} : memref<80x512xf32, #tpu.memory_space<vmem>>, vector<8x512xf32>,
    %c0_86 = arith.constant 0 : index
    %c0_87 = arith.constant 0 : index
    %123 = vector.load %arg8[%c0_86, %c0_87] : memref<80x512xf32, #tpu.memory_space<vmem>>, vector<80x512xf32>
    %124 = arith.truncf %123 : vector<80x512xf32> to vector<80x512xbf16>
    %c0_88 = arith.constant 0 : index
    %c0_89 = arith.constant 0 : index
    %125 = vector.load %arg2[%c0_88, %c0_89] : memref<512x128xbf16, #tpu.memory_space<vmem>>, vector<512x128xbf16>
    %cst_90 = arith.constant dense<0.000000e+00> : vector<80x128xf32>
    %126 = tpu.matmul %124, %125, %cst_90 {dimension_numbers = #tpu.dot_dimension_numbers<[1], [0], [0], [1], [0, 0, 1, 1], [], []>} : vector<80x512xbf16>, vector<512x128xbf16>, vector<80x128xf32> -> vector<80x128xf32>
    %c0_91 = arith.constant 0 : index
    %c0_92 = arith.constant 0 : index
    %127 = vector.load %arg3[%c0_91, %c0_92] : memref<1x128xf32, #tpu.memory_space<vmem>>, vector<1x128xf32>
    %128 = vector.broadcast %127 : vector<1x128xf32> to vector<80x128xf32>
    %129 = arith.addf %126, %128 : vector<80x128xf32>
    %cst_93 = arith.constant 0.000000e+00 : f32
    %130 = vector.broadcast %cst_93 : f32 to vector<8x128xf32>
    %cst_94 = arith.constant 5.000000e-01 : f32
    %131 = vector.broadcast %cst_94 : f32 to vector<8x128xf32>
    %132 = arith.mulf %130, %131 : vector<8x128xf32>
    %133 = vector.extract_strided_slice %129 {offsets = [0, 0], sizes = [8, 128], strides = [1, 1]} : vector<80x128xf32> to vector<8x128xf32>
    %134 = arith.addf %132, %133 : vector<8x128xf32>
    %cst_95 = arith.constant 5.000000e-01 : f32
    %135 = vector.broadcast %cst_95 : f32 to vector<8x128xf32>
    %136 = arith.cmpf oge, %134, %135 : vector<8x128xf32>
    %cst_96 = arith.constant 1.000000e+00 : f32
    %cst_97 = arith.constant 0.000000e+00 : f32
    %137 = vector.broadcast %cst_96 : f32 to vector<8x128xf32>
    %138 = vector.broadcast %cst_97 : f32 to vector<8x128xf32>
    %139 = arith.select %136, %137, %138 : vector<8x128xi1>, vector<8x128xf32>
    %c0_98 = arith.constant 0 : index
    %c0_99 = arith.constant 0 : index
    %140 = vector.load %arg9[%c0_98, %c0_99] : memref<80x128xf32, #tpu.memory_space<vmem>>, vector<8x128xf32>
    tpu.vector_store %arg9[%c0_98, %c0_99], %139 {strides = array<i32>} : memref<80x128xf32, #tpu.memory_space<vmem>>, vector<8x128xf32>,
    %cst_100 = arith.constant 0.000000e+00 : f32
    %141 = vector.broadcast %cst_100 : f32 to vector<8x128xf32>
    %142 = arith.select %136, %141, %134 : vector<8x128xi1>, vector<8x128xf32>
    %cst_101 = arith.constant 5.000000e-01 : f32
    %143 = vector.broadcast %cst_101 : f32 to vector<8x128xf32>
    %144 = arith.mulf %142, %143 : vector<8x128xf32>
    %145 = vector.extract_strided_slice %129 {offsets = [8, 0], sizes = [8, 128], strides = [1, 1]} : vector<80x128xf32> to vector<8x128xf32>
    %146 = arith.addf %144, %145 : vector<8x128xf32>
    %cst_102 = arith.constant 5.000000e-01 : f32
    %147 = vector.broadcast %cst_102 : f32 to vector<8x128xf32>
    %148 = arith.cmpf oge, %146, %147 : vector<8x128xf32>
    %cst_103 = arith.constant 1.000000e+00 : f32
    %cst_104 = arith.constant 0.000000e+00 : f32
    %149 = vector.broadcast %cst_103 : f32 to vector<8x128xf32>
    %150 = vector.broadcast %cst_104 : f32 to vector<8x128xf32>
    %151 = arith.select %148, %149, %150 : vector<8x128xi1>, vector<8x128xf32>
    %c8_105 = arith.constant 8 : index
    %c0_106 = arith.constant 0 : index
    %152 = vector.load %arg9[%c8_105, %c0_106] : memref<80x128xf32, #tpu.memory_space<vmem>>, vector<8x128xf32>
    tpu.vector_store %arg9[%c8_105, %c0_106], %151 {strides = array<i32>} : memref<80x128xf32, #tpu.memory_space<vmem>>, vector<8x128xf32>,
    %cst_107 = arith.constant 0.000000e+00 : f32
    %153 = vector.broadcast %cst_107 : f32 to vector<8x128xf32>
    %154 = arith.select %148, %153, %146 : vector<8x128xi1>, vector<8x128xf32>
    %cst_108 = arith.constant 5.000000e-01 : f32
    %155 = vector.broadcast %cst_108 : f32 to vector<8x128xf32>
    %156 = arith.mulf %154, %155 : vector<8x128xf32>
    %157 = vector.extract_strided_slice %129 {offsets = [16, 0], sizes = [8, 128], strides = [1, 1]} : vector<80x128xf32> to vector<8x128xf32>
    %158 = arith.addf %156, %157 : vector<8x128xf32>
    %cst_109 = arith.constant 5.000000e-01 : f32
    %159 = vector.broadcast %cst_109 : f32 to vector<8x128xf32>
    %160 = arith.cmpf oge, %158, %159 : vector<8x128xf32>
    %cst_110 = arith.constant 1.000000e+00 : f32
    %cst_111 = arith.constant 0.000000e+00 : f32
    %161 = vector.broadcast %cst_110 : f32 to vector<8x128xf32>
    %162 = vector.broadcast %cst_111 : f32 to vector<8x128xf32>
    %163 = arith.select %160, %161, %162 : vector<8x128xi1>, vector<8x128xf32>
    %c16_112 = arith.constant 16 : index
    %c0_113 = arith.constant 0 : index
    %164 = vector.load %arg9[%c16_112, %c0_113] : memref<80x128xf32, #tpu.memory_space<vmem>>, vector<8x128xf32>
    tpu.vector_store %arg9[%c16_112, %c0_113], %163 {strides = array<i32>} : memref<80x128xf32, #tpu.memory_space<vmem>>, vector<8x128xf32>,
    %cst_114 = arith.constant 0.000000e+00 : f32
    %165 = vector.broadcast %cst_114 : f32 to vector<8x128xf32>
    %166 = arith.select %160, %165, %158 : vector<8x128xi1>, vector<8x128xf32>
    %cst_115 = arith.constant 5.000000e-01 : f32
    %167 = vector.broadcast %cst_115 : f32 to vector<8x128xf32>
    %168 = arith.mulf %166, %167 : vector<8x128xf32>
    %169 = vector.extract_strided_slice %129 {offsets = [24, 0], sizes = [8, 128], strides = [1, 1]} : vector<80x128xf32> to vector<8x128xf32>
    %170 = arith.addf %168, %169 : vector<8x128xf32>
    %cst_116 = arith.constant 5.000000e-01 : f32
    %171 = vector.broadcast %cst_116 : f32 to vector<8x128xf32>
    %172 = arith.cmpf oge, %170, %171 : vector<8x128xf32>
    %cst_117 = arith.constant 1.000000e+00 : f32
    %cst_118 = arith.constant 0.000000e+00 : f32
    %173 = vector.broadcast %cst_117 : f32 to vector<8x128xf32>
    %174 = vector.broadcast %cst_118 : f32 to vector<8x128xf32>
    %175 = arith.select %172, %173, %174 : vector<8x128xi1>, vector<8x128xf32>
    %c24_119 = arith.constant 24 : index
    %c0_120 = arith.constant 0 : index
    %176 = vector.load %arg9[%c24_119, %c0_120] : memref<80x128xf32, #tpu.memory_space<vmem>>, vector<8x128xf32>
    tpu.vector_store %arg9[%c24_119, %c0_120], %175 {strides = array<i32>} : memref<80x128xf32, #tpu.memory_space<vmem>>, vector<8x128xf32>,
    %cst_121 = arith.constant 0.000000e+00 : f32
    %177 = vector.broadcast %cst_121 : f32 to vector<8x128xf32>
    %178 = arith.select %172, %177, %170 : vector<8x128xi1>, vector<8x128xf32>
    %cst_122 = arith.constant 5.000000e-01 : f32
    %179 = vector.broadcast %cst_122 : f32 to vector<8x128xf32>
    %180 = arith.mulf %178, %179 : vector<8x128xf32>
    %181 = vector.extract_strided_slice %129 {offsets = [32, 0], sizes = [8, 128], strides = [1, 1]} : vector<80x128xf32> to vector<8x128xf32>
    %182 = arith.addf %180, %181 : vector<8x128xf32>
    %cst_123 = arith.constant 5.000000e-01 : f32
    %183 = vector.broadcast %cst_123 : f32 to vector<8x128xf32>
    %184 = arith.cmpf oge, %182, %183 : vector<8x128xf32>
    %cst_124 = arith.constant 1.000000e+00 : f32
    %cst_125 = arith.constant 0.000000e+00 : f32
    %185 = vector.broadcast %cst_124 : f32 to vector<8x128xf32>
    %186 = vector.broadcast %cst_125 : f32 to vector<8x128xf32>
    %187 = arith.select %184, %185, %186 : vector<8x128xi1>, vector<8x128xf32>
    %c32_126 = arith.constant 32 : index
    %c0_127 = arith.constant 0 : index
    %188 = vector.load %arg9[%c32_126, %c0_127] : memref<80x128xf32, #tpu.memory_space<vmem>>, vector<8x128xf32>
    tpu.vector_store %arg9[%c32_126, %c0_127], %187 {strides = array<i32>} : memref<80x128xf32, #tpu.memory_space<vmem>>, vector<8x128xf32>,
    %cst_128 = arith.constant 0.000000e+00 : f32
    %189 = vector.broadcast %cst_128 : f32 to vector<8x128xf32>
    %190 = arith.select %184, %189, %182 : vector<8x128xi1>, vector<8x128xf32>
    %cst_129 = arith.constant 5.000000e-01 : f32
    %191 = vector.broadcast %cst_129 : f32 to vector<8x128xf32>
    %192 = arith.mulf %190, %191 : vector<8x128xf32>
    %193 = vector.extract_strided_slice %129 {offsets = [40, 0], sizes = [8, 128], strides = [1, 1]} : vector<80x128xf32> to vector<8x128xf32>
    %194 = arith.addf %192, %193 : vector<8x128xf32>
    %cst_130 = arith.constant 5.000000e-01 : f32
    %195 = vector.broadcast %cst_130 : f32 to vector<8x128xf32>
    %196 = arith.cmpf oge, %194, %195 : vector<8x128xf32>
    %cst_131 = arith.constant 1.000000e+00 : f32
    %cst_132 = arith.constant 0.000000e+00 : f32
    %197 = vector.broadcast %cst_131 : f32 to vector<8x128xf32>
    %198 = vector.broadcast %cst_132 : f32 to vector<8x128xf32>
    %199 = arith.select %196, %197, %198 : vector<8x128xi1>, vector<8x128xf32>
    %c40_133 = arith.constant 40 : index
    %c0_134 = arith.constant 0 : index
    %200 = vector.load %arg9[%c40_133, %c0_134] : memref<80x128xf32, #tpu.memory_space<vmem>>, vector<8x128xf32>
    tpu.vector_store %arg9[%c40_133, %c0_134], %199 {strides = array<i32>} : memref<80x128xf32, #tpu.memory_space<vmem>>, vector<8x128xf32>,
    %cst_135 = arith.constant 0.000000e+00 : f32
    %201 = vector.broadcast %cst_135 : f32 to vector<8x128xf32>
    %202 = arith.select %196, %201, %194 : vector<8x128xi1>, vector<8x128xf32>
    %cst_136 = arith.constant 5.000000e-01 : f32
    %203 = vector.broadcast %cst_136 : f32 to vector<8x128xf32>
    %204 = arith.mulf %202, %203 : vector<8x128xf32>
    %205 = vector.extract_strided_slice %129 {offsets = [48, 0], sizes = [8, 128], strides = [1, 1]} : vector<80x128xf32> to vector<8x128xf32>
    %206 = arith.addf %204, %205 : vector<8x128xf32>
    %cst_137 = arith.constant 5.000000e-01 : f32
    %207 = vector.broadcast %cst_137 : f32 to vector<8x128xf32>
    %208 = arith.cmpf oge, %206, %207 : vector<8x128xf32>
    %cst_138 = arith.constant 1.000000e+00 : f32
    %cst_139 = arith.constant 0.000000e+00 : f32
    %209 = vector.broadcast %cst_138 : f32 to vector<8x128xf32>
    %210 = vector.broadcast %cst_139 : f32 to vector<8x128xf32>
    %211 = arith.select %208, %209, %210 : vector<8x128xi1>, vector<8x128xf32>
    %c48_140 = arith.constant 48 : index
    %c0_141 = arith.constant 0 : index
    %212 = vector.load %arg9[%c48_140, %c0_141] : memref<80x128xf32, #tpu.memory_space<vmem>>, vector<8x128xf32>
    tpu.vector_store %arg9[%c48_140, %c0_141], %211 {strides = array<i32>} : memref<80x128xf32, #tpu.memory_space<vmem>>, vector<8x128xf32>,
    %cst_142 = arith.constant 0.000000e+00 : f32
    %213 = vector.broadcast %cst_142 : f32 to vector<8x128xf32>
    %214 = arith.select %208, %213, %206 : vector<8x128xi1>, vector<8x128xf32>
    %cst_143 = arith.constant 5.000000e-01 : f32
    %215 = vector.broadcast %cst_143 : f32 to vector<8x128xf32>
    %216 = arith.mulf %214, %215 : vector<8x128xf32>
    %217 = vector.extract_strided_slice %129 {offsets = [56, 0], sizes = [8, 128], strides = [1, 1]} : vector<80x128xf32> to vector<8x128xf32>
    %218 = arith.addf %216, %217 : vector<8x128xf32>
    %cst_144 = arith.constant 5.000000e-01 : f32
    %219 = vector.broadcast %cst_144 : f32 to vector<8x128xf32>
    %220 = arith.cmpf oge, %218, %219 : vector<8x128xf32>
    %cst_145 = arith.constant 1.000000e+00 : f32
    %cst_146 = arith.constant 0.000000e+00 : f32
    %221 = vector.broadcast %cst_145 : f32 to vector<8x128xf32>
    %222 = vector.broadcast %cst_146 : f32 to vector<8x128xf32>
    %223 = arith.select %220, %221, %222 : vector<8x128xi1>, vector<8x128xf32>
    %c56_147 = arith.constant 56 : index
    %c0_148 = arith.constant 0 : index
    %224 = vector.load %arg9[%c56_147, %c0_148] : memref<80x128xf32, #tpu.memory_space<vmem>>, vector<8x128xf32>
    tpu.vector_store %arg9[%c56_147, %c0_148], %223 {strides = array<i32>} : memref<80x128xf32, #tpu.memory_space<vmem>>, vector<8x128xf32>,
    %cst_149 = arith.constant 0.000000e+00 : f32
    %225 = vector.broadcast %cst_149 : f32 to vector<8x128xf32>
    %226 = arith.select %220, %225, %218 : vector<8x128xi1>, vector<8x128xf32>
    %cst_150 = arith.constant 5.000000e-01 : f32
    %227 = vector.broadcast %cst_150 : f32 to vector<8x128xf32>
    %228 = arith.mulf %226, %227 : vector<8x128xf32>
    %229 = vector.extract_strided_slice %129 {offsets = [64, 0], sizes = [8, 128], strides = [1, 1]} : vector<80x128xf32> to vector<8x128xf32>
    %230 = arith.addf %228, %229 : vector<8x128xf32>
    %cst_151 = arith.constant 5.000000e-01 : f32
    %231 = vector.broadcast %cst_151 : f32 to vector<8x128xf32>
    %232 = arith.cmpf oge, %230, %231 : vector<8x128xf32>
    %cst_152 = arith.constant 1.000000e+00 : f32
    %cst_153 = arith.constant 0.000000e+00 : f32
    %233 = vector.broadcast %cst_152 : f32 to vector<8x128xf32>
    %234 = vector.broadcast %cst_153 : f32 to vector<8x128xf32>
    %235 = arith.select %232, %233, %234 : vector<8x128xi1>, vector<8x128xf32>
    %c64_154 = arith.constant 64 : index
    %c0_155 = arith.constant 0 : index
    %236 = vector.load %arg9[%c64_154, %c0_155] : memref<80x128xf32, #tpu.memory_space<vmem>>, vector<8x128xf32>
    tpu.vector_store %arg9[%c64_154, %c0_155], %235 {strides = array<i32>} : memref<80x128xf32, #tpu.memory_space<vmem>>, vector<8x128xf32>,
    %cst_156 = arith.constant 0.000000e+00 : f32
    %237 = vector.broadcast %cst_156 : f32 to vector<8x128xf32>
    %238 = arith.select %232, %237, %230 : vector<8x128xi1>, vector<8x128xf32>
    %cst_157 = arith.constant 5.000000e-01 : f32
    %239 = vector.broadcast %cst_157 : f32 to vector<8x128xf32>
    %240 = arith.mulf %238, %239 : vector<8x128xf32>
    %241 = vector.extract_strided_slice %129 {offsets = [72, 0], sizes = [8, 128], strides = [1, 1]} : vector<80x128xf32> to vector<8x128xf32>
    %242 = arith.addf %240, %241 : vector<8x128xf32>
    %cst_158 = arith.constant 5.000000e-01 : f32
    %243 = vector.broadcast %cst_158 : f32 to vector<8x128xf32>
    %244 = arith.cmpf oge, %242, %243 : vector<8x128xf32>
    %cst_159 = arith.constant 1.000000e+00 : f32
    %cst_160 = arith.constant 0.000000e+00 : f32
    %245 = vector.broadcast %cst_159 : f32 to vector<8x128xf32>
    %246 = vector.broadcast %cst_160 : f32 to vector<8x128xf32>
    %247 = arith.select %244, %245, %246 : vector<8x128xi1>, vector<8x128xf32>
    %c72_161 = arith.constant 72 : index
    %c0_162 = arith.constant 0 : index
    %248 = vector.load %arg9[%c72_161, %c0_162] : memref<80x128xf32, #tpu.memory_space<vmem>>, vector<8x128xf32>
    tpu.vector_store %arg9[%c72_161, %c0_162], %247 {strides = array<i32>} : memref<80x128xf32, #tpu.memory_space<vmem>>, vector<8x128xf32>,
    %c0_163 = arith.constant 0 : index
    %c0_164 = arith.constant 0 : index
    %249 = vector.load %arg9[%c0_163, %c0_164] : memref<80x128xf32, #tpu.memory_space<vmem>>, vector<80x128xf32>
    %250 = arith.truncf %249 : vector<80x128xf32> to vector<80x128xbf16>
    %c0_165 = arith.constant 0 : index
    %c0_166 = arith.constant 0 : index
    %251 = vector.load %arg4[%c0_165, %c0_166] : memref<128x128xbf16, #tpu.memory_space<vmem>>, vector<128x128xbf16>
    %cst_167 = arith.constant dense<0.000000e+00> : vector<80x128xf32>
    %252 = tpu.matmul %250, %251, %cst_167 {dimension_numbers = #tpu.dot_dimension_numbers<[1], [0], [0], [1], [0, 0, 1, 1], [], []>} : vector<80x128xbf16>, vector<128x128xbf16>, vector<80x128xf32> -> vector<80x128xf32>
    %c0_168 = arith.constant 0 : index
    %c0_169 = arith.constant 0 : index
    %253 = vector.load %arg5[%c0_168, %c0_169] : memref<1x128xf32, #tpu.memory_space<vmem>>, vector<1x128xf32>
    %254 = vector.broadcast %253 : vector<1x128xf32> to vector<80x128xf32>
    %255 = arith.addf %252, %254 : vector<80x128xf32>
    %cst_170 = arith.constant 0.000000e+00 : f32
    %256 = vector.broadcast %cst_170 : f32 to vector<8x128xf32>
    %cst_171 = arith.constant 0.000000e+00 : f32
    %257 = vector.broadcast %cst_171 : f32 to vector<8x128xf32>
    %cst_172 = arith.constant 5.000000e-01 : f32
    %258 = vector.broadcast %cst_172 : f32 to vector<8x128xf32>
    %259 = arith.mulf %256, %258 : vector<8x128xf32>
    %260 = vector.extract_strided_slice %255 {offsets = [0, 0], sizes = [8, 128], strides = [1, 1]} : vector<80x128xf32> to vector<8x128xf32>
    %261 = arith.addf %259, %260 : vector<8x128xf32>
    %cst_173 = arith.constant 5.000000e-01 : f32
    %262 = vector.broadcast %cst_173 : f32 to vector<8x128xf32>
    %263 = arith.cmpf oge, %261, %262 : vector<8x128xf32>
    %cst_174 = arith.constant 1.000000e+00 : f32
    %cst_175 = arith.constant 0.000000e+00 : f32
    %264 = vector.broadcast %cst_174 : f32 to vector<8x128xf32>
    %265 = vector.broadcast %cst_175 : f32 to vector<8x128xf32>
    %266 = arith.select %263, %264, %265 : vector<8x128xi1>, vector<8x128xf32>
    %267 = arith.addf %257, %266 : vector<8x128xf32>
    %cst_176 = arith.constant 0.000000e+00 : f32
    %268 = vector.broadcast %cst_176 : f32 to vector<8x128xf32>
    %269 = arith.select %263, %268, %261 : vector<8x128xi1>, vector<8x128xf32>
    %cst_177 = arith.constant 5.000000e-01 : f32
    %270 = vector.broadcast %cst_177 : f32 to vector<8x128xf32>
    %271 = arith.mulf %269, %270 : vector<8x128xf32>
    %272 = vector.extract_strided_slice %255 {offsets = [8, 0], sizes = [8, 128], strides = [1, 1]} : vector<80x128xf32> to vector<8x128xf32>
    %273 = arith.addf %271, %272 : vector<8x128xf32>
    %cst_178 = arith.constant 5.000000e-01 : f32
    %274 = vector.broadcast %cst_178 : f32 to vector<8x128xf32>
    %275 = arith.cmpf oge, %273, %274 : vector<8x128xf32>
    %cst_179 = arith.constant 1.000000e+00 : f32
    %cst_180 = arith.constant 0.000000e+00 : f32
    %276 = vector.broadcast %cst_179 : f32 to vector<8x128xf32>
    %277 = vector.broadcast %cst_180 : f32 to vector<8x128xf32>
    %278 = arith.select %275, %276, %277 : vector<8x128xi1>, vector<8x128xf32>
    %279 = arith.addf %267, %278 : vector<8x128xf32>
    %cst_181 = arith.constant 0.000000e+00 : f32
    %280 = vector.broadcast %cst_181 : f32 to vector<8x128xf32>
    %281 = arith.select %275, %280, %273 : vector<8x128xi1>, vector<8x128xf32>
    %cst_182 = arith.constant 5.000000e-01 : f32
    %282 = vector.broadcast %cst_182 : f32 to vector<8x128xf32>
    %283 = arith.mulf %281, %282 : vector<8x128xf32>
    %284 = vector.extract_strided_slice %255 {offsets = [16, 0], sizes = [8, 128], strides = [1, 1]} : vector<80x128xf32> to vector<8x128xf32>
    %285 = arith.addf %283, %284 : vector<8x128xf32>
    %cst_183 = arith.constant 5.000000e-01 : f32
    %286 = vector.broadcast %cst_183 : f32 to vector<8x128xf32>
    %287 = arith.cmpf oge, %285, %286 : vector<8x128xf32>
    %cst_184 = arith.constant 1.000000e+00 : f32
    %cst_185 = arith.constant 0.000000e+00 : f32
    %288 = vector.broadcast %cst_184 : f32 to vector<8x128xf32>
    %289 = vector.broadcast %cst_185 : f32 to vector<8x128xf32>
    %290 = arith.select %287, %288, %289 : vector<8x128xi1>, vector<8x128xf32>
    %291 = arith.addf %279, %290 : vector<8x128xf32>
    %cst_186 = arith.constant 0.000000e+00 : f32
    %292 = vector.broadcast %cst_186 : f32 to vector<8x128xf32>
    %293 = arith.select %287, %292, %285 : vector<8x128xi1>, vector<8x128xf32>
    %cst_187 = arith.constant 5.000000e-01 : f32
    %294 = vector.broadcast %cst_187 : f32 to vector<8x128xf32>
    %295 = arith.mulf %293, %294 : vector<8x128xf32>
    %296 = vector.extract_strided_slice %255 {offsets = [24, 0], sizes = [8, 128], strides = [1, 1]} : vector<80x128xf32> to vector<8x128xf32>
    %297 = arith.addf %295, %296 : vector<8x128xf32>
    %cst_188 = arith.constant 5.000000e-01 : f32
    %298 = vector.broadcast %cst_188 : f32 to vector<8x128xf32>
    %299 = arith.cmpf oge, %297, %298 : vector<8x128xf32>
    %cst_189 = arith.constant 1.000000e+00 : f32
    %cst_190 = arith.constant 0.000000e+00 : f32
    %300 = vector.broadcast %cst_189 : f32 to vector<8x128xf32>
    %301 = vector.broadcast %cst_190 : f32 to vector<8x128xf32>
    %302 = arith.select %299, %300, %301 : vector<8x128xi1>, vector<8x128xf32>
    %303 = arith.addf %291, %302 : vector<8x128xf32>
    %cst_191 = arith.constant 0.000000e+00 : f32
    %304 = vector.broadcast %cst_191 : f32 to vector<8x128xf32>
    %305 = arith.select %299, %304, %297 : vector<8x128xi1>, vector<8x128xf32>
    %cst_192 = arith.constant 5.000000e-01 : f32
    %306 = vector.broadcast %cst_192 : f32 to vector<8x128xf32>
    %307 = arith.mulf %305, %306 : vector<8x128xf32>
    %308 = vector.extract_strided_slice %255 {offsets = [32, 0], sizes = [8, 128], strides = [1, 1]} : vector<80x128xf32> to vector<8x128xf32>
    %309 = arith.addf %307, %308 : vector<8x128xf32>
    %cst_193 = arith.constant 5.000000e-01 : f32
    %310 = vector.broadcast %cst_193 : f32 to vector<8x128xf32>
    %311 = arith.cmpf oge, %309, %310 : vector<8x128xf32>
    %cst_194 = arith.constant 1.000000e+00 : f32
    %cst_195 = arith.constant 0.000000e+00 : f32
    %312 = vector.broadcast %cst_194 : f32 to vector<8x128xf32>
    %313 = vector.broadcast %cst_195 : f32 to vector<8x128xf32>
    %314 = arith.select %311, %312, %313 : vector<8x128xi1>, vector<8x128xf32>
    %315 = arith.addf %303, %314 : vector<8x128xf32>
    %cst_196 = arith.constant 0.000000e+00 : f32
    %316 = vector.broadcast %cst_196 : f32 to vector<8x128xf32>
    %317 = arith.select %311, %316, %309 : vector<8x128xi1>, vector<8x128xf32>
    %cst_197 = arith.constant 5.000000e-01 : f32
    %318 = vector.broadcast %cst_197 : f32 to vector<8x128xf32>
    %319 = arith.mulf %317, %318 : vector<8x128xf32>
    %320 = vector.extract_strided_slice %255 {offsets = [40, 0], sizes = [8, 128], strides = [1, 1]} : vector<80x128xf32> to vector<8x128xf32>
    %321 = arith.addf %319, %320 : vector<8x128xf32>
    %cst_198 = arith.constant 5.000000e-01 : f32
    %322 = vector.broadcast %cst_198 : f32 to vector<8x128xf32>
    %323 = arith.cmpf oge, %321, %322 : vector<8x128xf32>
    %cst_199 = arith.constant 1.000000e+00 : f32
    %cst_200 = arith.constant 0.000000e+00 : f32
    %324 = vector.broadcast %cst_199 : f32 to vector<8x128xf32>
    %325 = vector.broadcast %cst_200 : f32 to vector<8x128xf32>
    %326 = arith.select %323, %324, %325 : vector<8x128xi1>, vector<8x128xf32>
    %327 = arith.addf %315, %326 : vector<8x128xf32>
    %cst_201 = arith.constant 0.000000e+00 : f32
    %328 = vector.broadcast %cst_201 : f32 to vector<8x128xf32>
    %329 = arith.select %323, %328, %321 : vector<8x128xi1>, vector<8x128xf32>
    %cst_202 = arith.constant 5.000000e-01 : f32
    %330 = vector.broadcast %cst_202 : f32 to vector<8x128xf32>
    %331 = arith.mulf %329, %330 : vector<8x128xf32>
    %332 = vector.extract_strided_slice %255 {offsets = [48, 0], sizes = [8, 128], strides = [1, 1]} : vector<80x128xf32> to vector<8x128xf32>
    %333 = arith.addf %331, %332 : vector<8x128xf32>
    %cst_203 = arith.constant 5.000000e-01 : f32
    %334 = vector.broadcast %cst_203 : f32 to vector<8x128xf32>
    %335 = arith.cmpf oge, %333, %334 : vector<8x128xf32>
    %cst_204 = arith.constant 1.000000e+00 : f32
    %cst_205 = arith.constant 0.000000e+00 : f32
    %336 = vector.broadcast %cst_204 : f32 to vector<8x128xf32>
    %337 = vector.broadcast %cst_205 : f32 to vector<8x128xf32>
    %338 = arith.select %335, %336, %337 : vector<8x128xi1>, vector<8x128xf32>
    %339 = arith.addf %327, %338 : vector<8x128xf32>
    %cst_206 = arith.constant 0.000000e+00 : f32
    %340 = vector.broadcast %cst_206 : f32 to vector<8x128xf32>
    %341 = arith.select %335, %340, %333 : vector<8x128xi1>, vector<8x128xf32>
    %cst_207 = arith.constant 5.000000e-01 : f32
    %342 = vector.broadcast %cst_207 : f32 to vector<8x128xf32>
    %343 = arith.mulf %341, %342 : vector<8x128xf32>
    %344 = vector.extract_strided_slice %255 {offsets = [56, 0], sizes = [8, 128], strides = [1, 1]} : vector<80x128xf32> to vector<8x128xf32>
    %345 = arith.addf %343, %344 : vector<8x128xf32>
    %cst_208 = arith.constant 5.000000e-01 : f32
    %346 = vector.broadcast %cst_208 : f32 to vector<8x128xf32>
    %347 = arith.cmpf oge, %345, %346 : vector<8x128xf32>
    %cst_209 = arith.constant 1.000000e+00 : f32
    %cst_210 = arith.constant 0.000000e+00 : f32
    %348 = vector.broadcast %cst_209 : f32 to vector<8x128xf32>
    %349 = vector.broadcast %cst_210 : f32 to vector<8x128xf32>
    %350 = arith.select %347, %348, %349 : vector<8x128xi1>, vector<8x128xf32>
    %351 = arith.addf %339, %350 : vector<8x128xf32>
    %cst_211 = arith.constant 0.000000e+00 : f32
    %352 = vector.broadcast %cst_211 : f32 to vector<8x128xf32>
    %353 = arith.select %347, %352, %345 : vector<8x128xi1>, vector<8x128xf32>
    %cst_212 = arith.constant 5.000000e-01 : f32
    %354 = vector.broadcast %cst_212 : f32 to vector<8x128xf32>
    %355 = arith.mulf %353, %354 : vector<8x128xf32>
    %356 = vector.extract_strided_slice %255 {offsets = [64, 0], sizes = [8, 128], strides = [1, 1]} : vector<80x128xf32> to vector<8x128xf32>
    %357 = arith.addf %355, %356 : vector<8x128xf32>
    %cst_213 = arith.constant 5.000000e-01 : f32
    %358 = vector.broadcast %cst_213 : f32 to vector<8x128xf32>
    %359 = arith.cmpf oge, %357, %358 : vector<8x128xf32>
    %cst_214 = arith.constant 1.000000e+00 : f32
    %cst_215 = arith.constant 0.000000e+00 : f32
    %360 = vector.broadcast %cst_214 : f32 to vector<8x128xf32>
    %361 = vector.broadcast %cst_215 : f32 to vector<8x128xf32>
    %362 = arith.select %359, %360, %361 : vector<8x128xi1>, vector<8x128xf32>
    %363 = arith.addf %351, %362 : vector<8x128xf32>
    %cst_216 = arith.constant 0.000000e+00 : f32
    %364 = vector.broadcast %cst_216 : f32 to vector<8x128xf32>
    %365 = arith.select %359, %364, %357 : vector<8x128xi1>, vector<8x128xf32>
    %cst_217 = arith.constant 5.000000e-01 : f32
    %366 = vector.broadcast %cst_217 : f32 to vector<8x128xf32>
    %367 = arith.mulf %365, %366 : vector<8x128xf32>
    %368 = vector.extract_strided_slice %255 {offsets = [72, 0], sizes = [8, 128], strides = [1, 1]} : vector<80x128xf32> to vector<8x128xf32>
    %369 = arith.addf %367, %368 : vector<8x128xf32>
    %cst_218 = arith.constant 5.000000e-01 : f32
    %370 = vector.broadcast %cst_218 : f32 to vector<8x128xf32>
    %371 = arith.cmpf oge, %369, %370 : vector<8x128xf32>
    %cst_219 = arith.constant 1.000000e+00 : f32
    %cst_220 = arith.constant 0.000000e+00 : f32
    %372 = vector.broadcast %cst_219 : f32 to vector<8x128xf32>
    %373 = vector.broadcast %cst_220 : f32 to vector<8x128xf32>
    %374 = arith.select %371, %372, %373 : vector<8x128xi1>, vector<8x128xf32>
    %375 = arith.addf %363, %374 : vector<8x128xf32>
    %cst_221 = arith.constant 1.000000e-01 : f32
    %376 = vector.broadcast %cst_221 : f32 to vector<8x128xf32>
    %377 = arith.mulf %375, %376 : vector<8x128xf32>
    %c0_222 = arith.constant 0 : index
    %c0_223 = arith.constant 0 : index
    %378 = vector.load %arg6[%c0_222, %c0_223] : memref<8x128xf32, #tpu.memory_space<vmem>>, vector<8x128xf32>
    tpu.vector_store %arg6[%c0_222, %c0_223], %377 {strides = array<i32>} : memref<8x128xf32, #tpu.memory_space<vmem>>, vector<8x128xf32>,
    return
  }
}

</mosaic_0001>

<llo_original>
// kernel: spike_bcrnet_s.1
$region0: #{spike_bcrnet_s.1}
  #allocation0 [shape = 'u32[]', space=smem, size = 0x4, offset = 0x4, fixed_abs, tag = 'smem constant byte address 0x4 - core index']
  #allocation1 [shape = 'u32[144,128]{1,0:T(1,128)}', space=vmem, size = 0x12000, scoped, tag = 'internal scratch']
  #allocation2 [shape = 'f32[80,512]{1,0:T(8,128)}', space=vmem, size = 0x28000, scoped, tag = 'scratch operand']
  #allocation3 [shape = 'f32[80,512]{1,0:T(8,128)}', space=vmem, size = 0x28000, scoped, tag = 'scratch operand']
  #allocation4 [shape = 'f32[80,128]{1,0:T(8,128)}', space=vmem, size = 0xa000, scoped, tag = 'scratch operand']
  %s0 = inlined_call_operand.vmem [shape: bf16[80,384], index: 0, kind: input, shape index: {}]
  %s1 = inlined_call_operand.hbm [shape: bf16[384,512], index: 1, kind: input, shape index: {}]
  %s2 = inlined_call_operand.vmem [shape: bf16[512,128], index: 2, kind: input, shape index: {}]
  %s3 = inlined_call_operand.vmem [shape: f32[1,128], index: 3, kind: input, shape index: {}]
  %s4 = inlined_call_operand.hbm [shape: bf16[128,128], index: 4, kind: input, shape index: {}]
  %s5 = inlined_call_operand.vmem [shape: f32[1,128], index: 5, kind: input, shape index: {}]
  %s6 = inlined_call_operand.vmem [shape: f32[8,128], index: 6, kind: output, shape index: {}]
  %s7 = sld [smem:[#allocation0]]
  $region42: #{spike_bcrnet_s.1} parent=0
    _
  %s9 = ssub.s32 1, %s7
  %s10 = scalar_select 0, %s9, %s7
  $region1: #{spike_bcrnet_s.1} parent=0
    #allocation5 [shape = 'u8[393216]{0}', space=vmem, size = 0x60000, scoped, tag = 'input window, operand 1, single buffered']
    #allocation6 [shape = 's32[1]{0}', space=sflag, size = 0x4, scoped, tag = 'scoped memory for spike_bcrnet_s.1']
    #allocation7 [shape = 'u8[32768]{0}', space=vmem, size = 0x8000, scoped, tag = 'input window, operand 4, single buffered']
    #allocation8 [shape = 's32[1]{0}', space=sflag, size = 0x4, scoped, tag = 'scoped memory for spike_bcrnet_s.1']
    %11 = vsyncpa [#allocation6], 0
    %12 = vsyncpa [#allocation8], 0
    // Predicated region
    $region2: #{spike_bcrnet_s.1} parent=1 // pred_check
      _
    $region3: #{spike_bcrnet_s.1} parent=1 // pred_check_branch
      %14 = sbr.rel (0) target = $region5
    $region4: #{spike_bcrnet_s.1} parent=1 // pred_region
      _
    $region5: #{spike_bcrnet_s.1} parent=1 // pred_fallthru
      _
    // Predicated region
    $region6: #{spike_bcrnet_s.1} parent=1 // pred_check
      _
    $region7: #{spike_bcrnet_s.1} parent=1 // pred_check_branch
      %16 = sbr.rel (0) target = $region9
    $region8: #{spike_bcrnet_s.1} parent=1 // pred_region
      %s18 = ssub.s32 12288, 12288
      %19 = vsyncadd [#allocation6], %s18
      %s20 = sshll.u32 [#allocation5], 4
      %s21 = int_to_ptr.vmem [resolvable:$true] %s20
      %26 = dma.hbm_to_vmem [thread:$0]  %s1, 12288, %s21, [#allocation6], 256, 256, 16
    $region9: #{spike_bcrnet_s.1} parent=1 // pred_fallthru
      _
    // Predicated region
    $region10: #{spike_bcrnet_s.1} parent=1 // pred_check
      _
    $region11: #{spike_bcrnet_s.1} parent=1 // pred_check_branch
      %28 = sbr.rel (0) target = $region13
    $region12: #{spike_bcrnet_s.1} parent=1 // pred_region
      _
    $region13: #{spike_bcrnet_s.1} parent=1 // pred_fallthru
      _
    // Predicated region
    $region14: #{spike_bcrnet_s.1} parent=1 // pred_check
      _
    $region15: #{spike_bcrnet_s.1} parent=1 // pred_check_branch
      %30 = sbr.rel (0) target = $region17
    $region16: #{spike_bcrnet_s.1} parent=1 // pred_region
      _
    $region17: #{spike_bcrnet_s.1} parent=1 // pred_fallthru
      _
    // Predicated region
    $region18: #{spike_bcrnet_s.1} parent=1 // pred_check
      _
    $region19: #{spike_bcrnet_s.1} parent=1 // pred_check_branch
      %32 = sbr.rel (0) target = $region21
    $region20: #{spike_bcrnet_s.1} parent=1 // pred_region
      %s34 = ssub.s32 1024, 1024
      %35 = vsyncadd [#allocation8], %s34
      %s36 = sshll.u32 [#allocation7], 4
      %s37 = int_to_ptr.vmem [resolvable:$true] %s36
      %42 = dma.hbm_to_vmem [thread:$0]  %s4, 1024, %s37, [#allocation8], 64, 64, 4
    $region21: #{spike_bcrnet_s.1} parent=1 // pred_fallthru
      _
    // Predicated region
    $region22: #{spike_bcrnet_s.1} parent=1 // pred_check
      _
    $region23: #{spike_bcrnet_s.1} parent=1 // pred_check_branch
      %44 = sbr.rel (0) target = $region25
    $region24: #{spike_bcrnet_s.1} parent=1 // pred_region
      _
    $region25: #{spike_bcrnet_s.1} parent=1 // pred_fallthru
      _
    // Predicated region
    $region26: #{spike_bcrnet_s.1} parent=1 // pred_check
      _
    $region27: #{spike_bcrnet_s.1} parent=1 // pred_check_branch
      %46 = sbr.rel (0) target = $region29
    $region28: #{spike_bcrnet_s.1} parent=1 // pred_region
      %47 = dma.done [#allocation6], 12288
    $region29: #{spike_bcrnet_s.1} parent=1 // pred_fallthru
      _
    // Predicated region
    $region30: #{spike_bcrnet_s.1} parent=1 // pred_check
      _
    $region31: #{spike_bcrnet_s.1} parent=1 // pred_check_branch
      %49 = sbr.rel (0) target = $region33
    $region32: #{spike_bcrnet_s.1} parent=1 // pred_region
      %50 = dma.done [#allocation8], 1024
    $region33: #{spike_bcrnet_s.1} parent=1 // pred_fallthru
      _
    %v52 = vld [vmem:[%s0] sm:$0xff]
    %v53 = vld [vmem:[%s0 + $0x8] sm:$0xf]
    %v54 = vld [vmem:[%s0 + $0xc] sm:$0xff]
    %v55 = vld [vmem:[%s0 + $0x14] sm:$0xf]
    %v56 = vld [vmem:[%s0 + $0x18] sm:$0xff]
    %v57 = vld [vmem:[%s0 + $0x20] sm:$0xf]
    %v58 = vld [vmem:[%s0 + $0x24] sm:$0xff]
    %v59 = vld [vmem:[%s0 + $0x2c] sm:$0xf]
    %v60 = vld [vmem:[%s0 + $0x30] sm:$0xff]
    %v61 = vld [vmem:[%s0 + $0x38] sm:$0xf]
    %v62 = vld [vmem:[%s0 + $0x3c] sm:$0xff]
    %v63 = vld [vmem:[%s0 + $0x44] sm:$0xf]
    %v64 = vld [vmem:[%s0 + $0x48] sm:$0xff]
    %v65 = vld [vmem:[%s0 + $0x50] sm:$0xf]
    %v66 = vld [vmem:[%s0 + $0x54] sm:$0xff]
    %v67 = vld [vmem:[%s0 + $0x5c] sm:$0xf]
    %v68 = vld [vmem:[%s0 + $0x60] sm:$0xff]
    %v69 = vld [vmem:[%s0 + $0x68] sm:$0xf]
    %v70 = vld [vmem:[%s0 + $0x6c] sm:$0xff]
    %v71 = vld [vmem:[%s0 + $0x74] sm:$0xf]
    %v72 = vld [vmem:[#allocation5] sm:$0xff]
    %v73 = vld [vmem:[#allocation5 + $0x8] sm:$0xff]
    %v74 = vld [vmem:[#allocation5 + $0x10] sm:$0xff]
    %v75 = vld [vmem:[#allocation5 + $0x18] sm:$0xff]
    %v76 = vld [vmem:[#allocation5 + $0x20] sm:$0xff]
    %v77 = vld [vmem:[#allocation5 + $0x28] sm:$0xff]
    %v78 = vld [vmem:[#allocation5 + $0x30] sm:$0xff]
    %v79 = vld [vmem:[#allocation5 + $0x38] sm:$0xff]
    %v80 = vld [vmem:[#allocation5 + $0x40] sm:$0xff]
    %v81 = vld [vmem:[#allocation5 + $0x48] sm:$0xff]
    %v82 = vld [vmem:[#allocation5 + $0x50] sm:$0xff]
    %v83 = vld [vmem:[#allocation5 + $0x58] sm:$0xff]
    %v84 = vld [vmem:[#allocation5 + $0x60] sm:$0xff]
    %v85 = vld [vmem:[#allocation5 + $0x68] sm:$0xff]
    %v86 = vld [vmem:[#allocation5 + $0x70] sm:$0xff]
    %v87 = vld [vmem:[#allocation5 + $0x78] sm:$0xff]
    %v88 = vld [vmem:[#allocation5 + $0x80] sm:$0xff]
    %v89 = vld [vmem:[#allocation5 + $0x88] sm:$0xff]
    %v90 = vld [vmem:[#allocation5 + $0x90] sm:$0xff]
    %v91 = vld [vmem:[#allocation5 + $0x98] sm:$0xff]
    %v92 = vld [vmem:[#allocation5 + $0xa0] sm:$0xff]
    %v93 = vld [vmem:[#allocation5 + $0xa8] sm:$0xff]
    %v94 = vld [vmem:[#allocation5 + $0xb0] sm:$0xff]
    %v95 = vld [vmem:[#allocation5 + $0xb8] sm:$0xff]
    %v96 = vld [vmem:[#allocation5 + $0xc0] sm:$0xff]
    %v97 = vld [vmem:[#allocation5 + $0xc8] sm:$0xff]
    %v98 = vld [vmem:[#allocation5 + $0xd0] sm:$0xff]
    %v99 = vld [vmem:[#allocation5 + $0xd8] sm:$0xff]
    %v100 = vld [vmem:[#allocation5 + $0xe0] sm:$0xff]
    %v101 = vld [vmem:[#allocation5 + $0xe8] sm:$0xff]
    %v102 = vld [vmem:[#allocation5 + $0xf0] sm:$0xff]
    %v103 = vld [vmem:[#allocation5 + $0xf8] sm:$0xff]
    %v104 = vld [vmem:[#allocation5 + $0x100] sm:$0xff]
    %v105 = vld [vmem:[#allocation5 + $0x108] sm:$0xff]
    %v106 = vld [vmem:[#allocation5 + $0x110] sm:$0xff]
    %v107 = vld [vmem:[#allocation5 + $0x118] sm:$0xff]
    %v108 = vld [vmem:[#allocation5 + $0x120] sm:$0xff]
    %v109 = vld [vmem:[#allocation5 + $0x128] sm:$0xff]
    %v110 = vld [vmem:[#allocation5 + $0x130] sm:$0xff]
    %v111 = vld [vmem:[#allocation5 + $0x138] sm:$0xff]
    %v112 = vld [vmem:[#allocation5 + $0x140] sm:$0xff]
    %v113 = vld [vmem:[#allocation5 + $0x148] sm:$0xff]
    %v114 = vld [vmem:[#allocation5 + $0x150] sm:$0xff]
    %v115 = vld [vmem:[#allocation5 + $0x158] sm:$0xff]
    %v116 = vld [vmem:[#allocation5 + $0x160] sm:$0xff]
    %v117 = vld [vmem:[#allocation5 + $0x168] sm:$0xff]
    %v118 = vld [vmem:[#allocation5 + $0x170] sm:$0xff]
    %v119 = vld [vmem:[#allocation5 + $0x178] sm:$0xff]
    %v120 = vld [vmem:[#allocation5 + $0x180] sm:$0xff]
    %v121 = vld [vmem:[#allocation5 + $0x188] sm:$0xff]
    %v122 = vld [vmem:[#allocation5 + $0x190] sm:$0xff]
    %v123 = vld [vmem:[#allocation5 + $0x198] sm:$0xff]
    %v124 = vld [vmem:[#allocation5 + $0x1a0] sm:$0xff]
    %v125 = vld [vmem:[#allocation5 + $0x1a8] sm:$0xff]
    %v126 = vld [vmem:[#allocation5 + $0x1b0] sm:$0xff]
    %v127 = vld [vmem:[#allocation5 + $0x1b8] sm:$0xff]
    %v128 = vld [vmem:[#allocation5 + $0x1c0] sm:$0xff]
    %v129 = vld [vmem:[#allocation5 + $0x1c8] sm:$0xff]
    %v130 = vld [vmem:[#allocation5 + $0x1d0] sm:$0xff]
    %v131 = vld [vmem:[#allocation5 + $0x1d8] sm:$0xff]
    %v132 = vld [vmem:[#allocation5 + $0x1e0] sm:$0xff]
    %v133 = vld [vmem:[#allocation5 + $0x1e8] sm:$0xff]
    %v134 = vld [vmem:[#allocation5 + $0x1f0] sm:$0xff]
    %v135 = vld [vmem:[#allocation5 + $0x1f8] sm:$0xff]
    %v136 = vld [vmem:[#allocation5 + $0x200] sm:$0xff]
    %v137 = vld [vmem:[#allocation5 + $0x208] sm:$0xff]
    %v138 = vld [vmem:[#allocation5 + $0x210] sm:$0xff]
    %v139 = vld [vmem:[#allocation5 + $0x218] sm:$0xff]
    %v140 = vld [vmem:[#allocation5 + $0x220] sm:$0xff]
    %v141 = vld [vmem:[#allocation5 + $0x228] sm:$0xff]
    %v142 = vld [vmem:[#allocation5 + $0x230] sm:$0xff]
    %v143 = vld [vmem:[#allocation5 + $0x238] sm:$0xff]
    %v144 = vld [vmem:[#allocation5 + $0x240] sm:$0xff]
    %v145 = vld [vmem:[#allocation5 + $0x248] sm:$0xff]
    %v146 = vld [vmem:[#allocation5 + $0x250] sm:$0xff]
    %v147 = vld [vmem:[#allocation5 + $0x258] sm:$0xff]
    %v148 = vld [vmem:[#allocation5 + $0x260] sm:$0xff]
    %v149 = vld [vmem:[#allocation5 + $0x268] sm:$0xff]
    %v150 = vld [vmem:[#allocation5 + $0x270] sm:$0xff]
    %v151 = vld [vmem:[#allocation5 + $0x278] sm:$0xff]
    %v152 = vld [vmem:[#allocation5 + $0x280] sm:$0xff]
    %v153 = vld [vmem:[#allocation5 + $0x288] sm:$0xff]
    %v154 = vld [vmem:[#allocation5 + $0x290] sm:$0xff]
    %v155 = vld [vmem:[#allocation5 + $0x298] sm:$0xff]
    %v156 = vld [vmem:[#allocation5 + $0x2a0] sm:$0xff]
    %v157 = vld [vmem:[#allocation5 + $0x2a8] sm:$0xff]
    %v158 = vld [vmem:[#allocation5 + $0x2b0] sm:$0xff]
    %v159 = vld [vmem:[#allocation5 + $0x2b8] sm:$0xff]
    %v160 = vld [vmem:[#allocation5 + $0x2c0] sm:$0xff]
    %v161 = vld [vmem:[#allocation5 + $0x2c8] sm:$0xff]
    %v162 = vld [vmem:[#allocation5 + $0x2d0] sm:$0xff]
    %v163 = vld [vmem:[#allocation5 + $0x2d8] sm:$0xff]
    %v164 = vld [vmem:[#allocation5 + $0x2e0] sm:$0xff]
    %v165 = vld [vmem:[#allocation5 + $0x2e8] sm:$0xff]
    %v166 = vld [vmem:[#allocation5 + $0x2f0] sm:$0xff]
    %v167 = vld [vmem:[#allocation5 + $0x2f8] sm:$0xff]
    %v188 = vunpack.c.l.b16 %v52
    %v189 = vunpack.c.h.b16 %v52
    %v190 = vunpack.c.l.b16 %v53
    %v191 = vunpack.c.l.b16 %v54
    %v192 = vunpack.c.h.b16 %v54
    %v193 = vunpack.c.l.b16 %v55
    %v194 = vunpack.c.l.b16 %v56
    %v195 = vunpack.c.h.b16 %v56
    %v196 = vunpack.c.l.b16 %v57
    %v197 = vunpack.c.l.b16 %v58
    %v198 = vunpack.c.h.b16 %v58
    %v199 = vunpack.c.l.b16 %v59
    %v200 = vunpack.c.l.b16 %v60
    %v201 = vunpack.c.h.b16 %v60
    %v202 = vunpack.c.l.b16 %v61
    %v203 = vunpack.c.l.b16 %v62
    %v204 = vunpack.c.h.b16 %v62
    %v205 = vunpack.c.l.b16 %v63
    %v206 = vunpack.c.l.b16 %v64
    %v207 = vunpack.c.h.b16 %v64
    %v208 = vunpack.c.l.b16 %v65
    %v209 = vunpack.c.l.b16 %v66
    %v210 = vunpack.c.h.b16 %v66
    %v211 = vunpack.c.l.b16 %v67
    %v212 = vunpack.c.l.b16 %v68
    %v213 = vunpack.c.h.b16 %v68
    %v214 = vunpack.c.l.b16 %v69
    %v215 = vunpack.c.l.b16 %v70
    %v216 = vunpack.c.h.b16 %v70
    %v217 = vunpack.c.l.b16 %v71
    %v218 = vpack.c.b16 %v191, %v188
    %v219 = vpack.c.b16 %v192, %v189
    %v220 = vpack.c.b16 %v193, %v190
    %v221 = vpack.c.b16 %v197, %v194
    %v222 = vpack.c.b16 %v198, %v195
    %v223 = vpack.c.b16 %v199, %v196
    %v224 = vpack.c.b16 %v203, %v200
    %v225 = vpack.c.b16 %v204, %v201
    %v226 = vpack.c.b16 %v205, %v202
    %v227 = vpack.c.b16 %v209, %v206
    %v228 = vpack.c.b16 %v210, %v207
    %v229 = vpack.c.b16 %v211, %v208
    %v230 = vpack.c.b16 %v215, %v212
    %v231 = vpack.c.b16 %v216, %v213
    %v232 = vpack.c.b16 %v217, %v214
    %v344 = vunpack.c.l.b16 %v72
    %v345 = vunpack.c.h.b16 %v72
    %v346 = vunpack.c.l.b16 %v73
    %v347 = vunpack.c.h.b16 %v73
    %v348 = vunpack.c.l.b16 %v74
    %v349 = vunpack.c.h.b16 %v74
    %v350 = vunpack.c.l.b16 %v75
    %v351 = vunpack.c.h.b16 %v75
    %v352 = vunpack.c.l.b16 %v76
    %v353 = vunpack.c.h.b16 %v76
    %v354 = vunpack.c.l.b16 %v77
    %v355 = vunpack.c.h.b16 %v77
    %v356 = vunpack.c.l.b16 %v78
    %v357 = vunpack.c.h.b16 %v78
    %v358 = vunpack.c.l.b16 %v79
    %v359 = vunpack.c.h.b16 %v79
    %v360 = vunpack.c.l.b16 %v80
    %v361 = vunpack.c.h.b16 %v80
    %v362 = vunpack.c.l.b16 %v81
    %v363 = vunpack.c.h.b16 %v81
    %v364 = vunpack.c.l.b16 %v82
    %v365 = vunpack.c.h.b16 %v82
    %v366 = vunpack.c.l.b16 %v83
    %v367 = vunpack.c.h.b16 %v83
    %v368 = vunpack.c.l.b16 %v84
    %v369 = vunpack.c.h.b16 %v84
    %v370 = vunpack.c.l.b16 %v85
    %v371 = vunpack.c.h.b16 %v85
    %v372 = vunpack.c.l.b16 %v86
    %v373 = vunpack.c.h.b16 %v86
    %v374 = vunpack.c.l.b16 %v87
    %v375 = vunpack.c.h.b16 %v87
    %v376 = vunpack.c.l.b16 %v88
    %v377 = vunpack.c.h.b16 %v88
    %v378 = vunpack.c.l.b16 %v89
    %v379 = vunpack.c.h.b16 %v89
    %v380 = vunpack.c.l.b16 %v90
    %v381 = vunpack.c.h.b16 %v90
    %v382 = vunpack.c.l.b16 %v91
    %v383 = vunpack.c.h.b16 %v91
    %v384 = vunpack.c.l.b16 %v92
    %v385 = vunpack.c.h.b16 %v92
    %v386 = vunpack.c.l.b16 %v93
    %v387 = vunpack.c.h.b16 %v93
    %v388 = vunpack.c.l.b16 %v94
    %v389 = vunpack.c.h.b16 %v94
    %v390 = vunpack.c.l.b16 %v95
    %v391 = vunpack.c.h.b16 %v95
    %v392 = vunpack.c.l.b16 %v96
    %v393 = vunpack.c.h.b16 %v96
    %v394 = vunpack.c.l.b16 %v97
    %v395 = vunpack.c.h.b16 %v97
    %v396 = vunpack.c.l.b16 %v98
    %v397 = vunpack.c.h.b16 %v98
    %v398 = vunpack.c.l.b16 %v99
    %v399 = vunpack.c.h.b16 %v99
    %v400 = vunpack.c.l.b16 %v100
    %v401 = vunpack.c.h.b16 %v100
    %v402 = vunpack.c.l.b16 %v101
    %v403 = vunpack.c.h.b16 %v101
    %v404 = vunpack.c.l.b16 %v102
    %v405 = vunpack.c.h.b16 %v102
    %v406 = vunpack.c.l.b16 %v103
    %v407 = vunpack.c.h.b16 %v103
    %v408 = vunpack.c.l.b16 %v104
    %v409 = vunpack.c.h.b16 %v104
    %v410 = vunpack.c.l.b16 %v105
    %v411 = vunpack.c.h.b16 %v105
    %v412 = vunpack.c.l.b16 %v106
    %v413 = vunpack.c.h.b16 %v106
    %v414 = vunpack.c.l.b16 %v107
    %v415 = vunpack.c.h.b16 %v107
    %v416 = vunpack.c.l.b16 %v108
    %v417 = vunpack.c.h.b16 %v108
    %v418 = vunpack.c.l.b16 %v109
    %v419 = vunpack.c.h.b16 %v109
    %v420 = vunpack.c.l.b16 %v110
    %v421 = vunpack.c.h.b16 %v110
    %v422 = vunpack.c.l.b16 %v111
    %v423 = vunpack.c.h.b16 %v111
    %v424 = vunpack.c.l.b16 %v112
    %v425 = vunpack.c.h.b16 %v112
    %v426 = vunpack.c.l.b16 %v113
    %v427 = vunpack.c.h.b16 %v113
    %v428 = vunpack.c.l.b16 %v114
    %v429 = vunpack.c.h.b16 %v114
    %v430 = vunpack.c.l.b16 %v115
    %v431 = vunpack.c.h.b16 %v115
    %v432 = vunpack.c.l.b16 %v116
    %v433 = vunpack.c.h.b16 %v116
    %v434 = vunpack.c.l.b16 %v117
    %v435 = vunpack.c.h.b16 %v117
    %v436 = vunpack.c.l.b16 %v118
    %v437 = vunpack.c.h.b16 %v118
    %v438 = vunpack.c.l.b16 %v119
    %v439 = vunpack.c.h.b16 %v119
    %v440 = vunpack.c.l.b16 %v120
    %v441 = vunpack.c.h.b16 %v120
    %v442 = vunpack.c.l.b16 %v121
    %v443 = vunpack.c.h.b16 %v121
    %v444 = vunpack.c.l.b16 %v122
    %v445 = vunpack.c.h.b16 %v122
    %v446 = vunpack.c.l.b16 %v123
    %v447 = vunpack.c.h.b16 %v123
    %v448 = vunpack.c.l.b16 %v124
    %v449 = vunpack.c.h.b16 %v124
    %v450 = vunpack.c.l.b16 %v125
    %v451 = vunpack.c.h.b16 %v125
    %v452 = vunpack.c.l.b16 %v126
    %v453 = vunpack.c.h.b16 %v126
    %v454 = vunpack.c.l.b16 %v127
    %v455 = vunpack.c.h.b16 %v127
    %v456 = vunpack.c.l.b16 %v128
    %v457 = vunpack.c.h.b16 %v128
    %v458 = vunpack.c.l.b16 %v129
    %v459 = vunpack.c.h.b16 %v129
    %v460 = vunpack.c.l.b16 %v130
    %v461 = vunpack.c.h.b16 %v130
    %v462 = vunpack.c.l.b16 %v131
    %v463 = vunpack.c.h.b16 %v131
    %v464 = vunpack.c.l.b16 %v132
    %v465 = vunpack.c.h.b16 %v132
    %v466 = vunpack.c.l.b16 %v133
    %v467 = vunpack.c.h.b16 %v133
    %v468 = vunpack.c.l.b16 %v134
    %v469 = vunpack.c.h.b16 %v134
    %v470 = vunpack.c.l.b16 %v135
    %v471 = vunpack.c.h.b16 %v135
    %v472 = vunpack.c.l.b16 %v136
    %v473 = vunpack.c.h.b16 %v136
    %v474 = vunpack.c.l.b16 %v137
    %v475 = vunpack.c.h.b16 %v137
    %v476 = vunpack.c.l.b16 %v138
    %v477 = vunpack.c.h.b16 %v138
    %v478 = vunpack.c.l.b16 %v139
    %v479 = vunpack.c.h.b16 %v139
    %v480 = vunpack.c.l.b16 %v140
    %v481 = vunpack.c.h.b16 %v140
    %v482 = vunpack.c.l.b16 %v141
    %v483 = vunpack.c.h.b16 %v141
    %v484 = vunpack.c.l.b16 %v142
    %v485 = vunpack.c.h.b16 %v142
    %v486 = vunpack.c.l.b16 %v143
    %v487 = vunpack.c.h.b16 %v143
    %v488 = vunpack.c.l.b16 %v144
    %v489 = vunpack.c.h.b16 %v144
    %v490 = vunpack.c.l.b16 %v145
    %v491 = vunpack.c.h.b16 %v145
    %v492 = vunpack.c.l.b16 %v146
    %v493 = vunpack.c.h.b16 %v146
    %v494 = vunpack.c.l.b16 %v147
    %v495 = vunpack.c.h.b16 %v147
    %v496 = vunpack.c.l.b16 %v148
    %v497 = vunpack.c.h.b16 %v148
    %v498 = vunpack.c.l.b16 %v149
    %v499 = vunpack.c.h.b16 %v149
    %v500 = vunpack.c.l.b16 %v150
    %v501 = vunpack.c.h.b16 %v150
    %v502 = vunpack.c.l.b16 %v151
    %v503 = vunpack.c.h.b16 %v151
    %v504 = vunpack.c.l.b16 %v152
    %v505 = vunpack.c.h.b16 %v152
    %v506 = vunpack.c.l.b16 %v153
    %v507 = vunpack.c.h.b16 %v153
    %v508 = vunpack.c.l.b16 %v154
    %v509 = vunpack.c.h.b16 %v154
    %v510 = vunpack.c.l.b16 %v155
    %v511 = vunpack.c.h.b16 %v155
    %v512 = vunpack.c.l.b16 %v156
    %v513 = vunpack.c.h.b16 %v156
    %v514 = vunpack.c.l.b16 %v157
    %v515 = vunpack.c.h.b16 %v157
    %v516 = vunpack.c.l.b16 %v158
    %v517 = vunpack.c.h.b16 %v158
    %v518 = vunpack.c.l.b16 %v159
    %v519 = vunpack.c.h.b16 %v159
    %v520 = vunpack.c.l.b16 %v160
    %v521 = vunpack.c.h.b16 %v160
    %v522 = vunpack.c.l.b16 %v161
    %v523 = vunpack.c.h.b16 %v161
    %v524 = vunpack.c.l.b16 %v162
    %v525 = vunpack.c.h.b16 %v162
    %v526 = vunpack.c.l.b16 %v163
    %v527 = vunpack.c.h.b16 %v163
    %v528 = vunpack.c.l.b16 %v164
    %v529 = vunpack.c.h.b16 %v164
    %v530 = vunpack.c.l.b16 %v165
    %v531 = vunpack.c.h.b16 %v165
    %v532 = vunpack.c.l.b16 %v166
    %v533 = vunpack.c.h.b16 %v166
    %v534 = vunpack.c.l.b16 %v167
    %v535 = vunpack.c.h.b16 %v167
    %v536 = vpack.c.b16 %v348, %v344
    %v537 = vpack.c.b16 %v349, %v345
    %v538 = vpack.c.b16 %v350, %v346
    %v539 = vpack.c.b16 %v351, %v347
    %v540 = vpack.c.b16 %v356, %v352
    %v541 = vpack.c.b16 %v357, %v353
    %v542 = vpack.c.b16 %v358, %v354
    %v543 = vpack.c.b16 %v359, %v355
    %v544 = vpack.c.b16 %v364, %v360
    %v545 = vpack.c.b16 %v365, %v361
    %v546 = vpack.c.b16 %v366, %v362
    %v547 = vpack.c.b16 %v367, %v363
    %v548 = vpack.c.b16 %v372, %v368
    %v549 = vpack.c.b16 %v373, %v369
    %v550 = vpack.c.b16 %v374, %v370
    %v551 = vpack.c.b16 %v375, %v371
    %v552 = vpack.c.b16 %v380, %v376
    %v553 = vpack.c.b16 %v381, %v377
    %v554 = vpack.c.b16 %v382, %v378
    %v555 = vpack.c.b16 %v383, %v379
    %v556 = vpack.c.b16 %v388, %v384
    %v557 = vpack.c.b16 %v389, %v385
    %v558 = vpack.c.b16 %v390, %v386
    %v559 = vpack.c.b16 %v391, %v387
    %v560 = vpack.c.b16 %v396, %v392
    %v561 = vpack.c.b16 %v397, %v393
    %v562 = vpack.c.b16 %v398, %v394
    %v563 = vpack.c.b16 %v399, %v395
    %v564 = vpack.c.b16 %v404, %v400
    %v565 = vpack.c.b16 %v405, %v401
    %v566 = vpack.c.b16 %v406, %v402
    %v567 = vpack.c.b16 %v407, %v403
    %v568 = vpack.c.b16 %v412, %v408
    %v569 = vpack.c.b16 %v413, %v409
    %v570 = vpack.c.b16 %v414, %v410
    %v571 = vpack.c.b16 %v415, %v411
    %v572 = vpack.c.b16 %v420, %v416
    %v573 = vpack.c.b16 %v421, %v417
    %v574 = vpack.c.b16 %v422, %v418
    %v575 = vpack.c.b16 %v423, %v419
    %v576 = vpack.c.b16 %v428, %v424
    %v577 = vpack.c.b16 %v429, %v425
    %v578 = vpack.c.b16 %v430, %v426
    %v579 = vpack.c.b16 %v431, %v427
    %v580 = vpack.c.b16 %v436, %v432
    %v581 = vpack.c.b16 %v437, %v433
    %v582 = vpack.c.b16 %v438, %v434
    %v583 = vpack.c.b16 %v439, %v435
    %v584 = vpack.c.b16 %v444, %v440
    %v585 = vpack.c.b16 %v445, %v441
    %v586 = vpack.c.b16 %v446, %v442
    %v587 = vpack.c.b16 %v447, %v443
    %v588 = vpack.c.b16 %v452, %v448
    %v589 = vpack.c.b16 %v453, %v449
    %v590 = vpack.c.b16 %v454, %v450
    %v591 = vpack.c.b16 %v455, %v451
    %v592 = vpack.c.b16 %v460, %v456
    %v593 = vpack.c.b16 %v461, %v457
    %v594 = vpack.c.b16 %v462, %v458
    %v595 = vpack.c.b16 %v463, %v459
    %v596 = vpack.c.b16 %v468, %v464
    %v597 = vpack.c.b16 %v469, %v465
    %v598 = vpack.c.b16 %v470, %v466
    %v599 = vpack.c.b16 %v471, %v467
    %v600 = vpack.c.b16 %v476, %v472
    %v601 = vpack.c.b16 %v477, %v473
    %v602 = vpack.c.b16 %v478, %v474
    %v603 = vpack.c.b16 %v479, %v475
    %v604 = vpack.c.b16 %v484, %v480
    %v605 = vpack.c.b16 %v485, %v481
    %v606 = vpack.c.b16 %v486, %v482
    %v607 = vpack.c.b16 %v487, %v483
    %v608 = vpack.c.b16 %v492, %v488
    %v609 = vpack.c.b16 %v493, %v489
    %v610 = vpack.c.b16 %v494, %v490
    %v611 = vpack.c.b16 %v495, %v491
    %v612 = vpack.c.b16 %v500, %v496
    %v613 = vpack.c.b16 %v501, %v497
    %v614 = vpack.c.b16 %v502, %v498
    %v615 = vpack.c.b16 %v503, %v499
    %v616 = vpack.c.b16 %v508, %v504
    %v617 = vpack.c.b16 %v509, %v505
    %v618 = vpack.c.b16 %v510, %v506
    %v619 = vpack.c.b16 %v511, %v507
    %v620 = vpack.c.b16 %v516, %v512
    %v621 = vpack.c.b16 %v517, %v513
    %v622 = vpack.c.b16 %v518, %v514
    %v623 = vpack.c.b16 %v519, %v515
    %v624 = vpack.c.b16 %v524, %v520
    %v625 = vpack.c.b16 %v525, %v521
    %v626 = vpack.c.b16 %v526, %v522
    %v627 = vpack.c.b16 %v527, %v523
    %v628 = vpack.c.b16 %v532, %v528
    %v629 = vpack.c.b16 %v533, %v529
    %v630 = vpack.c.b16 %v534, %v530
    %v631 = vpack.c.b16 %v535, %v531
    %728 = vmatprep.subr.bf16.mxu0 %v565
    %729 = vmatpush1.bf16.msra.mxu0 %v564
    %730 = vmatprep.subr.bf16.mxu0 %v561
    %731 = vmatpush1.bf16.msra.mxu0 %v560
    %732 = vmatprep.subr.bf16.mxu0 %v557
    %733 = vmatpush1.bf16.msra.mxu0 %v556
    %734 = vmatprep.subr.bf16.mxu0 %v553
    %735 = vmatpush1.bf16.msra.mxu0 %v552
    %736 = vmatprep.subr.bf16.mxu0 %v549
    %737 = vmatpush1.bf16.msra.mxu0 %v548
    %738 = vmatprep.subr.bf16.mxu0 %v545
    %739 = vmatpush1.bf16.msra.mxu0 %v544
    %740 = vmatprep.subr.bf16.mxu0 %v541
    %741 = vmatpush1.bf16.msra.mxu0 %v540
    %742 = vmatprep.subr.bf16.mxu0 %v537
    %743 = vmatpush1.bf16.msra.mxu0 %v536
    %744 = vmatprep.subr.bf16.mxu0 %v597
    %745 = vmatpush2.bf16.msra.mxu0 %v596
    %746 = vmatprep.subr.bf16.mxu0 %v593
    %747 = vmatpush2.bf16.msra.mxu0 %v592
    %748 = vmatprep.subr.bf16.mxu0 %v589
    %749 = vmatpush2.bf16.msra.mxu0 %v588
    %750 = vmatprep.subr.bf16.mxu0 %v585
    %751 = vmatpush2.bf16.msra.mxu0 %v584
    %752 = vmatprep.subr.bf16.mxu0 %v581
    %753 = vmatpush2.bf16.msra.mxu0 %v580
    %754 = vmatprep.subr.bf16.mxu0 %v577
    %755 = vmatpush2.bf16.msra.mxu0 %v576
    %756 = vmatprep.subr.bf16.mxu0 %v573
    %757 = vmatpush2.bf16.msra.mxu0 %v572
    %758 = vmatprep.subr.bf16.mxu0 %v569
    %759 = vmatpush2.bf16.msra.mxu0 %v568
    %760 = vmatprep.mubr.bf16.mxu0 %v219
    %761 = vmatmul.mubr.bf16.gmra.mxu0 %v218
    %v762 = vpop.f32.mrf.mxu0
    %v763 = vadd.f32 0.0, %v762
    %v764 = vpop.f32.mrf.mxu0
    %v765 = vadd.f32 0.0, %v764
    %v766 = vpop.f32.mrf.mxu0
    %v767 = vadd.f32 0.0, %v766
    %v768 = vpop.f32.mrf.mxu0
    %v769 = vadd.f32 0.0, %v768
    %770 = vmatprep.mubr.bf16.mxu0 %v222
    %771 = vmatmul.mubr.bf16.gmra.mxu0 %v221
    %v772 = vpop.f32.mrf.mxu0
    %v773 = vadd.f32 0.0, %v772
    %v774 = vpop.f32.mrf.mxu0
    %v775 = vadd.f32 0.0, %v774
    %v776 = vpop.f32.mrf.mxu0
    %v777 = vadd.f32 0.0, %v776
    %v778 = vpop.f32.mrf.mxu0
    %v779 = vadd.f32 0.0, %v778
    %780 = vmatprep.mubr.bf16.mxu0 %v225
    %781 = vmatmul.mubr.bf16.gmra.mxu0 %v224
    %v782 = vpop.f32.mrf.mxu0
    %v783 = vadd.f32 0.0, %v782
    %v784 = vpop.f32.mrf.mxu0
    %v785 = vadd.f32 0.0, %v784
    %v786 = vpop.f32.mrf.mxu0
    %v787 = vadd.f32 0.0, %v786
    %v788 = vpop.f32.mrf.mxu0
    %v789 = vadd.f32 0.0, %v788
    %790 = vmatprep.mubr.bf16.mxu0 %v228
    %791 = vmatmul.mubr.bf16.gmra.mxu0 %v227
    %v792 = vpop.f32.mrf.mxu0
    %v793 = vadd.f32 0.0, %v792
    %v794 = vpop.f32.mrf.mxu0
    %v795 = vadd.f32 0.0, %v794
    %v796 = vpop.f32.mrf.mxu0
    %v797 = vadd.f32 0.0, %v796
    %v798 = vpop.f32.mrf.mxu0
    %v799 = vadd.f32 0.0, %v798
    %800 = vmatprep.mubr.bf16.mxu0 %v231
    %801 = vmatmul.mubr.bf16.gmra.mxu0 %v230
    %v802 = vpop.f32.mrf.mxu0
    %v803 = vadd.f32 0.0, %v802
    %v804 = vpop.f32.mrf.mxu0
    %v805 = vadd.f32 0.0, %v804
    %v806 = vpop.f32.mrf.mxu0
    %v807 = vadd.f32 0.0, %v806
    %v808 = vpop.f32.mrf.mxu0
    %v809 = vadd.f32 0.0, %v808
    %810 = vdwg.mxu0
    %811 = vmatprep.subr.bf16.mxu0 %v629
    %812 = vmatpush1.bf16.msra.mxu0 %v628
    %813 = vmatprep.subr.bf16.mxu0 %v625
    %814 = vmatpush1.bf16.msra.mxu0 %v624
    %815 = vmatprep.subr.bf16.mxu0 %v621
    %816 = vmatpush1.bf16.msra.mxu0 %v620
    %817 = vmatprep.subr.bf16.mxu0 %v617
    %818 = vmatpush1.bf16.msra.mxu0 %v616
    %819 = vmatprep.subr.bf16.mxu0 %v613
    %820 = vmatpush1.bf16.msra.mxu0 %v612
    %821 = vmatprep.subr.bf16.mxu0 %v609
    %822 = vmatpush1.bf16.msra.mxu0 %v608
    %823 = vmatprep.subr.bf16.mxu0 %v605
    %824 = vmatpush1.bf16.msra.mxu0 %v604
    %825 = vmatprep.subr.bf16.mxu0 %v601
    %826 = vmatpush1.bf16.msra.mxu0 %v600
    %827 = vmatprep.subr.bf16.mxu0 0
    %828 = vmatpush2.bf16.msra.mxu0 0
    %829 = vmatprep.subr.bf16.mxu0 0
    %830 = vmatpush2.bf16.msra.mxu0 0
    %831 = vmatprep.subr.bf16.mxu0 0
    %832 = vmatpush2.bf16.msra.mxu0 0
    %833 = vmatprep.subr.bf16.mxu0 0
    %834 = vmatpush2.bf16.msra.mxu0 0
    %835 = vmatprep.subr.bf16.mxu0 0
    %836 = vmatpush2.bf16.msra.mxu0 0
    %837 = vmatprep.subr.bf16.mxu0 0
    %838 = vmatpush2.bf16.msra.mxu0 0
    %839 = vmatprep.subr.bf16.mxu0 0
    %840 = vmatpush2.bf16.msra.mxu0 0
    %841 = vmatprep.subr.bf16.mxu0 0
    %842 = vmatpush2.bf16.msra.mxu0 0
    %843 = vmatprep.mubr.bf16.mxu0 0
    %844 = vmatmul.mubr.bf16.gmra.mxu0 %v220
    %v845 = vpop.f32.mrf.mxu0
    %v846 = vadd.f32 %v763, %v845
    %v847 = vpop.f32.mrf.mxu0
    %v848 = vadd.f32 %v765, %v847
    %v849 = vpop.f32.mrf.mxu0
    %v850 = vadd.f32 %v767, %v849
    %v851 = vpop.f32.mrf.mxu0
    %v852 = vadd.f32 %v769, %v851
    %853 = vmatprep.mubr.bf16.mxu0 0
    %854 = vmatmul.mubr.bf16.gmra.mxu0 %v223
    %v855 = vpop.f32.mrf.mxu0
    %v856 = vadd.f32 %v773, %v855
    %v857 = vpop.f32.mrf.mxu0
    %v858 = vadd.f32 %v775, %v857
    %v859 = vpop.f32.mrf.mxu0
    %v860 = vadd.f32 %v777, %v859
    %v861 = vpop.f32.mrf.mxu0
    %v862 = vadd.f32 %v779, %v861
    %863 = vmatprep.mubr.bf16.mxu0 0
    %864 = vmatmul.mubr.bf16.gmra.mxu0 %v226
    %v865 = vpop.f32.mrf.mxu0
    %v866 = vadd.f32 %v783, %v865
    %v867 = vpop.f32.mrf.mxu0
    %v868 = vadd.f32 %v785, %v867
    %v869 = vpop.f32.mrf.mxu0
    %v870 = vadd.f32 %v787, %v869
    %v871 = vpop.f32.mrf.mxu0
    %v872 = vadd.f32 %v789, %v871
    %873 = vmatprep.mubr.bf16.mxu0 0
    %874 = vmatmul.mubr.bf16.gmra.mxu0 %v229
    %v875 = vpop.f32.mrf.mxu0
    %v876 = vadd.f32 %v793, %v875
    %v877 = vpop.f32.mrf.mxu0
    %v878 = vadd.f32 %v795, %v877
    %v879 = vpop.f32.mrf.mxu0
    %v880 = vadd.f32 %v797, %v879
    %v881 = vpop.f32.mrf.mxu0
    %v882 = vadd.f32 %v799, %v881
    %883 = vmatprep.mubr.bf16.mxu0 0
    %884 = vmatmul.mubr.bf16.gmra.mxu0 %v232
    %v885 = vpop.f32.mrf.mxu0
    %v886 = vadd.f32 %v803, %v885
    %v887 = vpop.f32.mrf.mxu0
    %v888 = vadd.f32 %v805, %v887
    %v889 = vpop.f32.mrf.mxu0
    %v890 = vadd.f32 %v807, %v889
    %v891 = vpop.f32.mrf.mxu0
    %v892 = vadd.f32 %v809, %v891
    %893 = vdwg.mxu0
    %894 = vmatprep.subr.bf16.mxu0 %v567
    %895 = vmatpush1.bf16.msra.mxu0 %v566
    %896 = vmatprep.subr.bf16.mxu0 %v563
    %897 = vmatpush1.bf16.msra.mxu0 %v562
    %898 = vmatprep.subr.bf16.mxu0 %v559
    %899 = vmatpush1.bf16.msra.mxu0 %v558
    %900 = vmatprep.subr.bf16.mxu0 %v555
    %901 = vmatpush1.bf16.msra.mxu0 %v554
    %902 = vmatprep.subr.bf16.mxu0 %v551
    %903 = vmatpush1.bf16.msra.mxu0 %v550
    %904 = vmatprep.subr.bf16.mxu0 %v547
    %905 = vmatpush1.bf16.msra.mxu0 %v546
    %906 = vmatprep.subr.bf16.mxu0 %v543
    %907 = vmatpush1.bf16.msra.mxu0 %v542
    %908 = vmatprep.subr.bf16.mxu0 %v539
    %909 = vmatpush1.bf16.msra.mxu0 %v538
    %910 = vmatprep.subr.bf16.mxu0 %v599
    %911 = vmatpush2.bf16.msra.mxu0 %v598
    %912 = vmatprep.subr.bf16.mxu0 %v595
    %913 = vmatpush2.bf16.msra.mxu0 %v594
    %914 = vmatprep.subr.bf16.mxu0 %v591
    %915 = vmatpush2.bf16.msra.mxu0 %v590
    %916 = vmatprep.subr.bf16.mxu0 %v587
    %917 = vmatpush2.bf16.msra.mxu0 %v586
    %918 = vmatprep.subr.bf16.mxu0 %v583
    %919 = vmatpush2.bf16.msra.mxu0 %v582
    %920 = vmatprep.subr.bf16.mxu0 %v579
    %921 = vmatpush2.bf16.msra.mxu0 %v578
    %922 = vmatprep.subr.bf16.mxu0 %v575
    %923 = vmatpush2.bf16.msra.mxu0 %v574
    %924 = vmatprep.subr.bf16.mxu0 %v571
    %925 = vmatpush2.bf16.msra.mxu0 %v570
    %926 = vmatprep.mubr.bf16.mxu0 %v219
    %927 = vmatmul.mubr.bf16.gmra.mxu0 %v218
    %v928 = vpop.f32.mrf.mxu0
    %v929 = vadd.f32 0.0, %v928
    %v930 = vpop.f32.mrf.mxu0
    %v931 = vadd.f32 0.0, %v930
    %v932 = vpop.f32.mrf.mxu0
    %v933 = vadd.f32 0.0, %v932
    %v934 = vpop.f32.mrf.mxu0
    %v935 = vadd.f32 0.0, %v934
    %936 = vmatprep.mubr.bf16.mxu0 %v222
    %937 = vmatmul.mubr.bf16.gmra.mxu0 %v221
    %v938 = vpop.f32.mrf.mxu0
    %v939 = vadd.f32 0.0, %v938
    %v940 = vpop.f32.mrf.mxu0
    %v941 = vadd.f32 0.0, %v940
    %v942 = vpop.f32.mrf.mxu0
    %v943 = vadd.f32 0.0, %v942
    %v944 = vpop.f32.mrf.mxu0
    %v945 = vadd.f32 0.0, %v944
    %946 = vmatprep.mubr.bf16.mxu0 %v225
    %947 = vmatmul.mubr.bf16.gmra.mxu0 %v224
    %v948 = vpop.f32.mrf.mxu0
    %v949 = vadd.f32 0.0, %v948
    %v950 = vpop.f32.mrf.mxu0
    %v951 = vadd.f32 0.0, %v950
    %v952 = vpop.f32.mrf.mxu0
    %v953 = vadd.f32 0.0, %v952
    %v954 = vpop.f32.mrf.mxu0
    %v955 = vadd.f32 0.0, %v954
    %956 = vmatprep.mubr.bf16.mxu0 %v228
    %957 = vmatmul.mubr.bf16.gmra.mxu0 %v227
    %v958 = vpop.f32.mrf.mxu0
    %v959 = vadd.f32 0.0, %v958
    %v960 = vpop.f32.mrf.mxu0
    %v961 = vadd.f32 0.0, %v960
    %v962 = vpop.f32.mrf.mxu0
    %v963 = vadd.f32 0.0, %v962
    %v964 = vpop.f32.mrf.mxu0
    %v965 = vadd.f32 0.0, %v964
    %966 = vmatprep.mubr.bf16.mxu0 %v231
    %967 = vmatmul.mubr.bf16.gmra.mxu0 %v230
    %v968 = vpop.f32.mrf.mxu0
    %v969 = vadd.f32 0.0, %v968
    %v970 = vpop.f32.mrf.mxu0
    %v971 = vadd.f32 0.0, %v970
    %v972 = vpop.f32.mrf.mxu0
    %v973 = vadd.f32 0.0, %v972
    %v974 = vpop.f32.mrf.mxu0
    %v975 = vadd.f32 0.0, %v974
    %976 = vdwg.mxu0
    %977 = vmatprep.subr.bf16.mxu0 %v631
    %978 = vmatpush1.bf16.msra.mxu0 %v630
    %979 = vmatprep.subr.bf16.mxu0 %v627
    %980 = vmatpush1.bf16.msra.mxu0 %v626
    %981 = vmatprep.subr.bf16.mxu0 %v623
    %982 = vmatpush1.bf16.msra.mxu0 %v622
    %983 = vmatprep.subr.bf16.mxu0 %v619
    %984 = vmatpush1.bf16.msra.mxu0 %v618
    %985 = vmatprep.subr.bf16.mxu0 %v615
    %986 = vmatpush1.bf16.msra.mxu0 %v614
    %987 = vmatprep.subr.bf16.mxu0 %v611
    %988 = vmatpush1.bf16.msra.mxu0 %v610
    %989 = vmatprep.subr.bf16.mxu0 %v607
    %990 = vmatpush1.bf16.msra.mxu0 %v606
    %991 = vmatprep.subr.bf16.mxu0 %v603
    %992 = vmatpush1.bf16.msra.mxu0 %v602
    %993 = vmatprep.subr.bf16.mxu0 0
    %994 = vmatpush2.bf16.msra.mxu0 0
    %995 = vmatprep.subr.bf16.mxu0 0
    %996 = vmatpush2.bf16.msra.mxu0 0
    %997 = vmatprep.subr.bf16.mxu0 0
    %998 = vmatpush2.bf16.msra.mxu0 0
    %999 = vmatprep.subr.bf16.mxu0 0
    %1000 = vmatpush2.bf16.msra.mxu0 0
    %1001 = vmatprep.subr.bf16.mxu0 0
    %1002 = vmatpush2.bf16.msra.mxu0 0
    %1003 = vmatprep.subr.bf16.mxu0 0
    %1004 = vmatpush2.bf16.msra.mxu0 0
    %1005 = vmatprep.subr.bf16.mxu0 0
    %1006 = vmatpush2.bf16.msra.mxu0 0
    %1007 = vmatprep.subr.bf16.mxu0 0
    %1008 = vmatpush2.bf16.msra.mxu0 0
    %1009 = vmatprep.mubr.bf16.mxu0 0
    %1010 = vmatmul.mubr.bf16.gmra.mxu0 %v220
    %v1011 = vpop.f32.mrf.mxu0
    %v1012 = vadd.f32 %v929, %v1011
    %v1013 = vpop.f32.mrf.mxu0
    %v1014 = vadd.f32 %v931, %v1013
    %v1015 = vpop.f32.mrf.mxu0
    %v1016 = vadd.f32 %v933, %v1015
    %v1017 = vpop.f32.mrf.mxu0
    %v1018 = vadd.f32 %v935, %v1017
    %1019 = vmatprep.mubr.bf16.mxu0 0
    %1020 = vmatmul.mubr.bf16.gmra.mxu0 %v223
    %v1021 = vpop.f32.mrf.mxu0
    %v1022 = vadd.f32 %v939, %v1021
    %v1023 = vpop.f32.mrf.mxu0
    %v1024 = vadd.f32 %v941, %v1023
    %v1025 = vpop.f32.mrf.mxu0
    %v1026 = vadd.f32 %v943, %v1025
    %v1027 = vpop.f32.mrf.mxu0
    %v1028 = vadd.f32 %v945, %v1027
    %1029 = vmatprep.mubr.bf16.mxu0 0
    %1030 = vmatmul.mubr.bf16.gmra.mxu0 %v226
    %v1031 = vpop.f32.mrf.mxu0
    %v1032 = vadd.f32 %v949, %v1031
    %v1033 = vpop.f32.mrf.mxu0
    %v1034 = vadd.f32 %v951, %v1033
    %v1035 = vpop.f32.mrf.mxu0
    %v1036 = vadd.f32 %v953, %v1035
    %v1037 = vpop.f32.mrf.mxu0
    %v1038 = vadd.f32 %v955, %v1037
    %1039 = vmatprep.mubr.bf16.mxu0 0
    %1040 = vmatmul.mubr.bf16.gmra.mxu0 %v229
    %v1041 = vpop.f32.mrf.mxu0
    %v1042 = vadd.f32 %v959, %v1041
    %v1043 = vpop.f32.mrf.mxu0
    %v1044 = vadd.f32 %v961, %v1043
    %v1045 = vpop.f32.mrf.mxu0
    %v1046 = vadd.f32 %v963, %v1045
    %v1047 = vpop.f32.mrf.mxu0
    %v1048 = vadd.f32 %v965, %v1047
    %1049 = vmatprep.mubr.bf16.mxu0 0
    %1050 = vmatmul.mubr.bf16.gmra.mxu0 %v232
    %v1051 = vpop.f32.mrf.mxu0
    %v1052 = vadd.f32 %v969, %v1051
    %v1053 = vpop.f32.mrf.mxu0
    %v1054 = vadd.f32 %v971, %v1053
    %v1055 = vpop.f32.mrf.mxu0
    %v1056 = vadd.f32 %v973, %v1055
    %v1057 = vpop.f32.mrf.mxu0
    %v1058 = vadd.f32 %v975, %v1057
    %1059 = vdwg.mxu0
    %1060 = vst [vmem:[#allocation2] sm:$0xff] %v846
    %1061 = vst [vmem:[#allocation2 + $0x8] sm:$0xff] %v848
    %1062 = vst [vmem:[#allocation2 + $0x10] sm:$0xff] %v1012
    %1063 = vst [vmem:[#allocation2 + $0x18] sm:$0xff] %v1014
    %1064 = vst [vmem:[#allocation2 + $0x20] sm:$0xff] %v850
    %1065 = vst [vmem:[#allocation2 + $0x28] sm:$0xff] %v852
    %1066 = vst [vmem:[#allocation2 + $0x30] sm:$0xff] %v1016
    %1067 = vst [vmem:[#allocation2 + $0x38] sm:$0xff] %v1018
    %1068 = vst [vmem:[#allocation2 + $0x40] sm:$0xff] %v856
    %1069 = vst [vmem:[#allocation2 + $0x48] sm:$0xff] %v858
    %1070 = vst [vmem:[#allocation2 + $0x50] sm:$0xff] %v1022
    %1071 = vst [vmem:[#allocation2 + $0x58] sm:$0xff] %v1024
    %1072 = vst [vmem:[#allocation2 + $0x60] sm:$0xff] %v860
    %1073 = vst [vmem:[#allocation2 + $0x68] sm:$0xff] %v862
    %1074 = vst [vmem:[#allocation2 + $0x70] sm:$0xff] %v1026
    %1075 = vst [vmem:[#allocation2 + $0x78] sm:$0xff] %v1028
    %1076 = vst [vmem:[#allocation2 + $0x80] sm:$0xff] %v866
    %1077 = vst [vmem:[#allocation2 + $0x88] sm:$0xff] %v868
    %1078 = vst [vmem:[#allocation2 + $0x90] sm:$0xff] %v1032
    %1079 = vst [vmem:[#allocation2 + $0x98] sm:$0xff] %v1034
    %1080 = vst [vmem:[#allocation2 + $0xa0] sm:$0xff] %v870
    %1081 = vst [vmem:[#allocation2 + $0xa8] sm:$0xff] %v872
    %1082 = vst [vmem:[#allocation2 + $0xb0] sm:$0xff] %v1036
    %1083 = vst [vmem:[#allocation2 + $0xb8] sm:$0xff] %v1038
    %1084 = vst [vmem:[#allocation2 + $0xc0] sm:$0xff] %v876
    %1085 = vst [vmem:[#allocation2 + $0xc8] sm:$0xff] %v878
    %1086 = vst [vmem:[#allocation2 + $0xd0] sm:$0xff] %v1042
    %1087 = vst [vmem:[#allocation2 + $0xd8] sm:$0xff] %v1044
    %1088 = vst [vmem:[#allocation2 + $0xe0] sm:$0xff] %v880
    %1089 = vst [vmem:[#allocation2 + $0xe8] sm:$0xff] %v882
    %1090 = vst [vmem:[#allocation2 + $0xf0] sm:$0xff] %v1046
    %1091 = vst [vmem:[#allocation2 + $0xf8] sm:$0xff] %v1048
    %1092 = vst [vmem:[#allocation2 + $0x100] sm:$0xff] %v886
    %1093 = vst [vmem:[#allocation2 + $0x108] sm:$0xff] %v888
    %1094 = vst [vmem:[#allocation2 + $0x110] sm:$0xff] %v1052
    %1095 = vst [vmem:[#allocation2 + $0x118] sm:$0xff] %v1054
    %1096 = vst [vmem:[#allocation2 + $0x120] sm:$0xff] %v890
    %1097 = vst [vmem:[#allocation2 + $0x128] sm:$0xff] %v892
    %1098 = vst [vmem:[#allocation2 + $0x130] sm:$0xff] %v1056
    %1099 = vst [vmem:[#allocation2 + $0x138] sm:$0xff] %v1058
    %v1100 = vld [vmem:[#allocation2] sm:$0xff]
    %v1101 = vld [vmem:[#allocation2 + $0x8] sm:$0xff]
    %v1102 = vld [vmem:[#allocation2 + $0x10] sm:$0xff]
    %v1103 = vld [vmem:[#allocation2 + $0x18] sm:$0xff]
    %v1104 = vadd.f32 %v1100, 0.0
    %v1105 = vadd.f32 %v1101, 0.0
    %v1106 = vadd.f32 %v1102, 0.0
    %v1107 = vadd.f32 %v1103, 0.0
    %vm1108 = vcmp.ge.f32.partialorder %v1104, 0.5
    %vm1109 = vcmp.ge.f32.partialorder %v1105, 0.5
    %vm1110 = vcmp.ge.f32.partialorder %v1106, 0.5
    %vm1111 = vcmp.ge.f32.partialorder %v1107, 0.5
    %v1112 = vsel %vm1108, 1.0, 0.0
    %v1113 = vsel %vm1109, 1.0, 0.0
    %v1114 = vsel %vm1110, 1.0, 0.0
    %v1115 = vsel %vm1111, 1.0, 0.0
    %1116 = vst [vmem:[#allocation3] sm:$0xff] %v1112
    %1117 = vst [vmem:[#allocation3 + $0x8] sm:$0xff] %v1113
    %1118 = vst [vmem:[#allocation3 + $0x10] sm:$0xff] %v1114
    %1119 = vst [vmem:[#allocation3 + $0x18] sm:$0xff] %v1115
    %v1120 = vsel %vm1108, 0.0, %v1104
    %v1121 = vsel %vm1109, 0.0, %v1105
    %v1122 = vsel %vm1110, 0.0, %v1106
    %v1123 = vsel %vm1111, 0.0, %v1107
    %v1124 = vmul.f32 %v1120, 0.5
    %v1125 = vmul.f32 %v1121, 0.5
    %v1126 = vmul.f32 %v1122, 0.5
    %v1127 = vmul.f32 %v1123, 0.5
    %v1128 = vld [vmem:[#allocation2 + $0x20] sm:$0xff]
    %v1129 = vld [vmem:[#allocation2 + $0x28] sm:$0xff]
    %v1130 = vld [vmem:[#allocation2 + $0x30] sm:$0xff]
    %v1131 = vld [vmem:[#allocation2 + $0x38] sm:$0xff]
    %v1132 = vadd.f32 %v1124, %v1128
    %v1133 = vadd.f32 %v1125, %v1129
    %v1134 = vadd.f32 %v1126, %v1130
    %v1135 = vadd.f32 %v1127, %v1131
    %vm1136 = vcmp.ge.f32.partialorder %v1132, 0.5
    %vm1137 = vcmp.ge.f32.partialorder %v1133, 0.5
    %vm1138 = vcmp.ge.f32.partialorder %v1134, 0.5
    %vm1139 = vcmp.ge.f32.partialorder %v1135, 0.5
    %v1140 = vsel %vm1136, 1.0, 0.0
    %v1141 = vsel %vm1137, 1.0, 0.0
    %v1142 = vsel %vm1138, 1.0, 0.0
    %v1143 = vsel %vm1139, 1.0, 0.0
    %1144 = vst [vmem:[#allocation3 + $0x20] sm:$0xff] %v1140
    %1145 = vst [vmem:[#allocation3 + $0x28] sm:$0xff] %v1141
    %1146 = vst [vmem:[#allocation3 + $0x30] sm:$0xff] %v1142
    %1147 = vst [vmem:[#allocation3 + $0x38] sm:$0xff] %v1143
    %v1148 = vsel %vm1136, 0.0, %v1132
    %v1149 = vsel %vm1137, 0.0, %v1133
    %v1150 = vsel %vm1138, 0.0, %v1134
    %v1151 = vsel %vm1139, 0.0, %v1135
    %v1152 = vmul.f32 %v1148, 0.5
    %v1153 = vmul.f32 %v1149, 0.5
    %v1154 = vmul.f32 %v1150, 0.5
    %v1155 = vmul.f32 %v1151, 0.5
    %v1156 = vld [vmem:[#allocation2 + $0x40] sm:$0xff]
    %v1157 = vld [vmem:[#allocation2 + $0x48] sm:$0xff]
    %v1158 = vld [vmem:[#allocation2 + $0x50] sm:$0xff]
    %v1159 = vld [vmem:[#allocation2 + $0x58] sm:$0xff]
    %v1160 = vadd.f32 %v1152, %v1156
    %v1161 = vadd.f32 %v1153, %v1157
    %v1162 = vadd.f32 %v1154, %v1158
    %v1163 = vadd.f32 %v1155, %v1159
    %vm1164 = vcmp.ge.f32.partialorder %v1160, 0.5
    %vm1165 = vcmp.ge.f32.partialorder %v1161, 0.5
    %vm1166 = vcmp.ge.f32.partialorder %v1162, 0.5
    %vm1167 = vcmp.ge.f32.partialorder %v1163, 0.5
    %v1168 = vsel %vm1164, 1.0, 0.0
    %v1169 = vsel %vm1165, 1.0, 0.0
    %v1170 = vsel %vm1166, 1.0, 0.0
    %v1171 = vsel %vm1167, 1.0, 0.0
    %1172 = vst [vmem:[#allocation3 + $0x40] sm:$0xff] %v1168
    %1173 = vst [vmem:[#allocation3 + $0x48] sm:$0xff] %v1169
    %1174 = vst [vmem:[#allocation3 + $0x50] sm:$0xff] %v1170
    %1175 = vst [vmem:[#allocation3 + $0x58] sm:$0xff] %v1171
    %v1176 = vsel %vm1164, 0.0, %v1160
    %v1177 = vsel %vm1165, 0.0, %v1161
    %v1178 = vsel %vm1166, 0.0, %v1162
    %v1179 = vsel %vm1167, 0.0, %v1163
    %v1180 = vmul.f32 %v1176, 0.5
    %v1181 = vmul.f32 %v1177, 0.5
    %v1182 = vmul.f32 %v1178, 0.5
    %v1183 = vmul.f32 %v1179, 0.5
    %v1184 = vld [vmem:[#allocation2 + $0x60] sm:$0xff]
    %v1185 = vld [vmem:[#allocation2 + $0x68] sm:$0xff]
    %v1186 = vld [vmem:[#allocation2 + $0x70] sm:$0xff]
    %v1187 = vld [vmem:[#allocation2 + $0x78] sm:$0xff]
    %v1188 = vadd.f32 %v1180, %v1184
    %v1189 = vadd.f32 %v1181, %v1185
    %v1190 = vadd.f32 %v1182, %v1186
    %v1191 = vadd.f32 %v1183, %v1187
    %vm1192 = vcmp.ge.f32.partialorder %v1188, 0.5
    %vm1193 = vcmp.ge.f32.partialorder %v1189, 0.5
    %vm1194 = vcmp.ge.f32.partialorder %v1190, 0.5
    %vm1195 = vcmp.ge.f32.partialorder %v1191, 0.5
    %v1196 = vsel %vm1192, 1.0, 0.0
    %v1197 = vsel %vm1193, 1.0, 0.0
    %v1198 = vsel %vm1194, 1.0, 0.0
    %v1199 = vsel %vm1195, 1.0, 0.0
    %1200 = vst [vmem:[#allocation3 + $0x60] sm:$0xff] %v1196
    %1201 = vst [vmem:[#allocation3 + $0x68] sm:$0xff] %v1197
    %1202 = vst [vmem:[#allocation3 + $0x70] sm:$0xff] %v1198
    %1203 = vst [vmem:[#allocation3 + $0x78] sm:$0xff] %v1199
    %v1204 = vsel %vm1192, 0.0, %v1188
    %v1205 = vsel %vm1193, 0.0, %v1189
    %v1206 = vsel %vm1194, 0.0, %v1190
    %v1207 = vsel %vm1195, 0.0, %v1191
    %v1208 = vmul.f32 %v1204, 0.5
    %v1209 = vmul.f32 %v1205, 0.5
    %v1210 = vmul.f32 %v1206, 0.5
    %v1211 = vmul.f32 %v1207, 0.5
    %v1212 = vld [vmem:[#allocation2 + $0x80] sm:$0xff]
    %v1213 = vld [vmem:[#allocation2 + $0x88] sm:$0xff]
    %v1214 = vld [vmem:[#allocation2 + $0x90] sm:$0xff]
    %v1215 = vld [vmem:[#allocation2 + $0x98] sm:$0xff]
    %v1216 = vadd.f32 %v1208, %v1212
    %v1217 = vadd.f32 %v1209, %v1213
    %v1218 = vadd.f32 %v1210, %v1214
    %v1219 = vadd.f32 %v1211, %v1215
    %vm1220 = vcmp.ge.f32.partialorder %v1216, 0.5
    %vm1221 = vcmp.ge.f32.partialorder %v1217, 0.5
    %vm1222 = vcmp.ge.f32.partialorder %v1218, 0.5
    %vm1223 = vcmp.ge.f32.partialorder %v1219, 0.5
    %v1224 = vsel %vm1220, 1.0, 0.0
    %v1225 = vsel %vm1221, 1.0, 0.0
    %v1226 = vsel %vm1222, 1.0, 0.0
    %v1227 = vsel %vm1223, 1.0, 0.0
    %1228 = vst [vmem:[#allocation3 + $0x80] sm:$0xff] %v1224
    %1229 = vst [vmem:[#allocation3 + $0x88] sm:$0xff] %v1225
    %1230 = vst [vmem:[#allocation3 + $0x90] sm:$0xff] %v1226
    %1231 = vst [vmem:[#allocation3 + $0x98] sm:$0xff] %v1227
    %v1232 = vsel %vm1220, 0.0, %v1216
    %v1233 = vsel %vm1221, 0.0, %v1217
    %v1234 = vsel %vm1222, 0.0, %v1218
    %v1235 = vsel %vm1223, 0.0, %v1219
    %v1236 = vmul.f32 %v1232, 0.5
    %v1237 = vmul.f32 %v1233, 0.5
    %v1238 = vmul.f32 %v1234, 0.5
    %v1239 = vmul.f32 %v1235, 0.5
    %v1240 = vld [vmem:[#allocation2 + $0xa0] sm:$0xff]
    %v1241 = vld [vmem:[#allocation2 + $0xa8] sm:$0xff]
    %v1242 = vld [vmem:[#allocation2 + $0xb0] sm:$0xff]
    %v1243 = vld [vmem:[#allocation2 + $0xb8] sm:$0xff]
    %v1244 = vadd.f32 %v1236, %v1240
    %v1245 = vadd.f32 %v1237, %v1241
    %v1246 = vadd.f32 %v1238, %v1242
    %v1247 = vadd.f32 %v1239, %v1243
    %vm1248 = vcmp.ge.f32.partialorder %v1244, 0.5
    %vm1249 = vcmp.ge.f32.partialorder %v1245, 0.5
    %vm1250 = vcmp.ge.f32.partialorder %v1246, 0.5
    %vm1251 = vcmp.ge.f32.partialorder %v1247, 0.5
    %v1252 = vsel %vm1248, 1.0, 0.0
    %v1253 = vsel %vm1249, 1.0, 0.0
    %v1254 = vsel %vm1250, 1.0, 0.0
    %v1255 = vsel %vm1251, 1.0, 0.0
    %1256 = vst [vmem:[#allocation3 + $0xa0] sm:$0xff] %v1252
    %1257 = vst [vmem:[#allocation3 + $0xa8] sm:$0xff] %v1253
    %1258 = vst [vmem:[#allocation3 + $0xb0] sm:$0xff] %v1254
    %1259 = vst [vmem:[#allocation3 + $0xb8] sm:$0xff] %v1255
    %v1260 = vsel %vm1248, 0.0, %v1244
    %v1261 = vsel %vm1249, 0.0, %v1245
    %v1262 = vsel %vm1250, 0.0, %v1246
    %v1263 = vsel %vm1251, 0.0, %v1247
    %v1264 = vmul.f32 %v1260, 0.5
    %v1265 = vmul.f32 %v1261, 0.5
    %v1266 = vmul.f32 %v1262, 0.5
    %v1267 = vmul.f32 %v1263, 0.5
    %v1268 = vld [vmem:[#allocation2 + $0xc0] sm:$0xff]
    %v1269 = vld [vmem:[#allocation2 + $0xc8] sm:$0xff]
    %v1270 = vld [vmem:[#allocation2 + $0xd0] sm:$0xff]
    %v1271 = vld [vmem:[#allocation2 + $0xd8] sm:$0xff]
    %v1272 = vadd.f32 %v1264, %v1268
    %v1273 = vadd.f32 %v1265, %v1269
    %v1274 = vadd.f32 %v1266, %v1270
    %v1275 = vadd.f32 %v1267, %v1271
    %vm1276 = vcmp.ge.f32.partialorder %v1272, 0.5
    %vm1277 = vcmp.ge.f32.partialorder %v1273, 0.5
    %vm1278 = vcmp.ge.f32.partialorder %v1274, 0.5
    %vm1279 = vcmp.ge.f32.partialorder %v1275, 0.5
    %v1280 = vsel %vm1276, 1.0, 0.0
    %v1281 = vsel %vm1277, 1.0, 0.0
    %v1282 = vsel %vm1278, 1.0, 0.0
    %v1283 = vsel %vm1279, 1.0, 0.0
    %1284 = vst [vmem:[#allocation3 + $0xc0] sm:$0xff] %v1280
    %1285 = vst [vmem:[#allocation3 + $0xc8] sm:$0xff] %v1281
    %1286 = vst [vmem:[#allocation3 + $0xd0] sm:$0xff] %v1282
    %1287 = vst [vmem:[#allocation3 + $0xd8] sm:$0xff] %v1283
    %v1288 = vsel %vm1276, 0.0, %v1272
    %v1289 = vsel %vm1277, 0.0, %v1273
    %v1290 = vsel %vm1278, 0.0, %v1274
    %v1291 = vsel %vm1279, 0.0, %v1275
    %v1292 = vmul.f32 %v1288, 0.5
    %v1293 = vmul.f32 %v1289, 0.5
    %v1294 = vmul.f32 %v1290, 0.5
    %v1295 = vmul.f32 %v1291, 0.5
    %v1296 = vld [vmem:[#allocation2 + $0xe0] sm:$0xff]
    %v1297 = vld [vmem:[#allocation2 + $0xe8] sm:$0xff]
    %v1298 = vld [vmem:[#allocation2 + $0xf0] sm:$0xff]
    %v1299 = vld [vmem:[#allocation2 + $0xf8] sm:$0xff]
    %v1300 = vadd.f32 %v1292, %v1296
    %v1301 = vadd.f32 %v1293, %v1297
    %v1302 = vadd.f32 %v1294, %v1298
    %v1303 = vadd.f32 %v1295, %v1299
    %vm1304 = vcmp.ge.f32.partialorder %v1300, 0.5
    %vm1305 = vcmp.ge.f32.partialorder %v1301, 0.5
    %vm1306 = vcmp.ge.f32.partialorder %v1302, 0.5
    %vm1307 = vcmp.ge.f32.partialorder %v1303, 0.5
    %v1308 = vsel %vm1304, 1.0, 0.0
    %v1309 = vsel %vm1305, 1.0, 0.0
    %v1310 = vsel %vm1306, 1.0, 0.0
    %v1311 = vsel %vm1307, 1.0, 0.0
    %1312 = vst [vmem:[#allocation3 + $0xe0] sm:$0xff] %v1308
    %1313 = vst [vmem:[#allocation3 + $0xe8] sm:$0xff] %v1309
    %1314 = vst [vmem:[#allocation3 + $0xf0] sm:$0xff] %v1310
    %1315 = vst [vmem:[#allocation3 + $0xf8] sm:$0xff] %v1311
    %v1316 = vsel %vm1304, 0.0, %v1300
    %v1317 = vsel %vm1305, 0.0, %v1301
    %v1318 = vsel %vm1306, 0.0, %v1302
    %v1319 = vsel %vm1307, 0.0, %v1303
    %v1320 = vmul.f32 %v1316, 0.5
    %v1321 = vmul.f32 %v1317, 0.5
    %v1322 = vmul.f32 %v1318, 0.5
    %v1323 = vmul.f32 %v1319, 0.5
    %v1324 = vld [vmem:[#allocation2 + $0x100] sm:$0xff]
    %v1325 = vld [vmem:[#allocation2 + $0x108] sm:$0xff]
    %v1326 = vld [vmem:[#allocation2 + $0x110] sm:$0xff]
    %v1327 = vld [vmem:[#allocation2 + $0x118] sm:$0xff]
    %v1328 = vadd.f32 %v1320, %v1324
    %v1329 = vadd.f32 %v1321, %v1325
    %v1330 = vadd.f32 %v1322, %v1326
    %v1331 = vadd.f32 %v1323, %v1327
    %vm1332 = vcmp.ge.f32.partialorder %v1328, 0.5
    %vm1333 = vcmp.ge.f32.partialorder %v1329, 0.5
    %vm1334 = vcmp.ge.f32.partialorder %v1330, 0.5
    %vm1335 = vcmp.ge.f32.partialorder %v1331, 0.5
    %v1336 = vsel %vm1332, 1.0, 0.0
    %v1337 = vsel %vm1333, 1.0, 0.0
    %v1338 = vsel %vm1334, 1.0, 0.0
    %v1339 = vsel %vm1335, 1.0, 0.0
    %1340 = vst [vmem:[#allocation3 + $0x100] sm:$0xff] %v1336
    %1341 = vst [vmem:[#allocation3 + $0x108] sm:$0xff] %v1337
    %1342 = vst [vmem:[#allocation3 + $0x110] sm:$0xff] %v1338
    %1343 = vst [vmem:[#allocation3 + $0x118] sm:$0xff] %v1339
    %v1344 = vsel %vm1332, 0.0, %v1328
    %v1345 = vsel %vm1333, 0.0, %v1329
    %v1346 = vsel %vm1334, 0.0, %v1330
    %v1347 = vsel %vm1335, 0.0, %v1331
    %v1348 = vmul.f32 %v1344, 0.5
    %v1349 = vmul.f32 %v1345, 0.5
    %v1350 = vmul.f32 %v1346, 0.5
    %v1351 = vmul.f32 %v1347, 0.5
    %v1352 = vld [vmem:[#allocation2 + $0x120] sm:$0xff]
    %v1353 = vld [vmem:[#allocation2 + $0x128] sm:$0xff]
    %v1354 = vld [vmem:[#allocation2 + $0x130] sm:$0xff]
    %v1355 = vld [vmem:[#allocation2 + $0x138] sm:$0xff]
    %v1356 = vadd.f32 %v1348, %v1352
    %v1357 = vadd.f32 %v1349, %v1353
    %v1358 = vadd.f32 %v1350, %v1354
    %v1359 = vadd.f32 %v1351, %v1355
    %vm1360 = vcmp.ge.f32.partialorder %v1356, 0.5
    %vm1361 = vcmp.ge.f32.partialorder %v1357, 0.5
    %vm1362 = vcmp.ge.f32.partialorder %v1358, 0.5
    %vm1363 = vcmp.ge.f32.partialorder %v1359, 0.5
    %v1364 = vsel %vm1360, 1.0, 0.0
    %v1365 = vsel %vm1361, 1.0, 0.0
    %v1366 = vsel %vm1362, 1.0, 0.0
    %v1367 = vsel %vm1363, 1.0, 0.0
    %1368 = vst [vmem:[#allocation3 + $0x120] sm:$0xff] %v1364
    %1369 = vst [vmem:[#allocation3 + $0x128] sm:$0xff] %v1365
    %1370 = vst [vmem:[#allocation3 + $0x130] sm:$0xff] %v1366
    %1371 = vst [vmem:[#allocation3 + $0x138] sm:$0xff] %v1367
    %v1372 = vld [vmem:[#allocation3] sm:$0xff]
    %v1373 = vld [vmem:[#allocation3 + $0x8] sm:$0xff]
    %v1374 = vld [vmem:[#allocation3 + $0x10] sm:$0xff]
    %v1375 = vld [vmem:[#allocation3 + $0x18] sm:$0xff]
    %v1376 = vld [vmem:[#allocation3 + $0x20] sm:$0xff]
    %v1377 = vld [vmem:[#allocation3 + $0x28] sm:$0xff]
    %v1378 = vld [vmem:[#allocation3 + $0x30] sm:$0xff]
    %v1379 = vld [vmem:[#allocation3 + $0x38] sm:$0xff]
    %v1380 = vld [vmem:[#allocation3 + $0x40] sm:$0xff]
    %v1381 = vld [vmem:[#allocation3 + $0x48] sm:$0xff]
    %v1382 = vld [vmem:[#allocation3 + $0x50] sm:$0xff]
    %v1383 = vld [vmem:[#allocation3 + $0x58] sm:$0xff]
    %v1384 = vld [vmem:[#allocation3 + $0x60] sm:$0xff]
    %v1385 = vld [vmem:[#allocation3 + $0x68] sm:$0xff]
    %v1386 = vld [vmem:[#allocation3 + $0x70] sm:$0xff]
    %v1387 = vld [vmem:[#allocation3 + $0x78] sm:$0xff]
    %v1388 = vld [vmem:[#allocation3 + $0x80] sm:$0xff]
    %v1389 = vld [vmem:[#allocation3 + $0x88] sm:$0xff]
    %v1390 = vld [vmem:[#allocation3 + $0x90] sm:$0xff]
    %v1391 = vld [vmem:[#allocation3 + $0x98] sm:$0xff]
    %v1392 = vld [vmem:[#allocation3 + $0xa0] sm:$0xff]
    %v1393 = vld [vmem:[#allocation3 + $0xa8] sm:$0xff]
    %v1394 = vld [vmem:[#allocation3 + $0xb0] sm:$0xff]
    %v1395 = vld [vmem:[#allocation3 + $0xb8] sm:$0xff]
    %v1396 = vld [vmem:[#allocation3 + $0xc0] sm:$0xff]
    %v1397 = vld [vmem:[#allocation3 + $0xc8] sm:$0xff]
    %v1398 = vld [vmem:[#allocation3 + $0xd0] sm:$0xff]
    %v1399 = vld [vmem:[#allocation3 + $0xd8] sm:$0xff]
    %v1400 = vld [vmem:[#allocation3 + $0xe0] sm:$0xff]
    %v1401 = vld [vmem:[#allocation3 + $0xe8] sm:$0xff]
    %v1402 = vld [vmem:[#allocation3 + $0xf0] sm:$0xff]
    %v1403 = vld [vmem:[#allocation3 + $0xf8] sm:$0xff]
    %v1404 = vld [vmem:[#allocation3 + $0x100] sm:$0xff]
    %v1405 = vld [vmem:[#allocation3 + $0x108] sm:$0xff]
    %v1406 = vld [vmem:[#allocation3 + $0x110] sm:$0xff]
    %v1407 = vld [vmem:[#allocation3 + $0x118] sm:$0xff]
    %v1408 = vld [vmem:[#allocation3 + $0x120] sm:$0xff]
    %v1409 = vld [vmem:[#allocation3 + $0x128] sm:$0xff]
    %v1410 = vld [vmem:[#allocation3 + $0x130] sm:$0xff]
    %v1411 = vld [vmem:[#allocation3 + $0x138] sm:$0xff]
    %v1412 = vpack.c.bf16 %v1376, %v1372
    %v1413 = vpack.c.bf16 %v1377, %v1373
    %v1414 = vpack.c.bf16 %v1378, %v1374
    %v1415 = vpack.c.bf16 %v1379, %v1375
    %v1416 = vpack.c.bf16 %v1384, %v1380
    %v1417 = vpack.c.bf16 %v1385, %v1381
    %v1418 = vpack.c.bf16 %v1386, %v1382
    %v1419 = vpack.c.bf16 %v1387, %v1383
    %v1420 = vpack.c.bf16 %v1392, %v1388
    %v1421 = vpack.c.bf16 %v1393, %v1389
    %v1422 = vpack.c.bf16 %v1394, %v1390
    %v1423 = vpack.c.bf16 %v1395, %v1391
    %v1424 = vpack.c.bf16 %v1400, %v1396
    %v1425 = vpack.c.bf16 %v1401, %v1397
    %v1426 = vpack.c.bf16 %v1402, %v1398
    %v1427 = vpack.c.bf16 %v1403, %v1399
    %v1428 = vpack.c.bf16 %v1408, %v1404
    %v1429 = vpack.c.bf16 %v1409, %v1405
    %v1430 = vpack.c.bf16 %v1410, %v1406
    %v1431 = vpack.c.bf16 %v1411, %v1407
    %v1432 = vld [vmem:[%s2] sm:$0xf]
    %v1433 = vld [vmem:[%s2 + $0x4] sm:$0xf]
    %v1434 = vld [vmem:[%s2 + $0x8] sm:$0xf]
    %v1435 = vld [vmem:[%s2 + $0xc] sm:$0xf]
    %v1436 = vld [vmem:[%s2 + $0x10] sm:$0xf]
    %v1437 = vld [vmem:[%s2 + $0x14] sm:$0xf]
    %v1438 = vld [vmem:[%s2 + $0x18] sm:$0xf]
    %v1439 = vld [vmem:[%s2 + $0x1c] sm:$0xf]
    %v1440 = vld [vmem:[%s2 + $0x20] sm:$0xf]
    %v1441 = vld [vmem:[%s2 + $0x24] sm:$0xf]
    %v1442 = vld [vmem:[%s2 + $0x28] sm:$0xf]
    %v1443 = vld [vmem:[%s2 + $0x2c] sm:$0xf]
    %v1444 = vld [vmem:[%s2 + $0x30] sm:$0xf]
    %v1445 = vld [vmem:[%s2 + $0x34] sm:$0xf]
    %v1446 = vld [vmem:[%s2 + $0x38] sm:$0xf]
    %v1447 = vld [vmem:[%s2 + $0x3c] sm:$0xf]
    %v1448 = vld [vmem:[%s2 + $0x40] sm:$0xf]
    %v1449 = vld [vmem:[%s2 + $0x44] sm:$0xf]
    %v1450 = vld [vmem:[%s2 + $0x48] sm:$0xf]
    %v1451 = vld [vmem:[%s2 + $0x4c] sm:$0xf]
    %v1452 = vld [vmem:[%s2 + $0x50] sm:$0xf]
    %v1453 = vld [vmem:[%s2 + $0x54] sm:$0xf]
    %v1454 = vld [vmem:[%s2 + $0x58] sm:$0xf]
    %v1455 = vld [vmem:[%s2 + $0x5c] sm:$0xf]
    %v1456 = vld [vmem:[%s2 + $0x60] sm:$0xf]
    %v1457 = vld [vmem:[%s2 + $0x64] sm:$0xf]
    %v1458 = vld [vmem:[%s2 + $0x68] sm:$0xf]
    %v1459 = vld [vmem:[%s2 + $0x6c] sm:$0xf]
    %v1460 = vld [vmem:[%s2 + $0x70] sm:$0xf]
    %v1461 = vld [vmem:[%s2 + $0x74] sm:$0xf]
    %v1462 = vld [vmem:[%s2 + $0x78] sm:$0xf]
    %v1463 = vld [vmem:[%s2 + $0x7c] sm:$0xf]
    %v1464 = vld [vmem:[%s2 + $0x80] sm:$0xf]
    %v1465 = vld [vmem:[%s2 + $0x84] sm:$0xf]
    %v1466 = vld [vmem:[%s2 + $0x88] sm:$0xf]
    %v1467 = vld [vmem:[%s2 + $0x8c] sm:$0xf]
    %v1468 = vld [vmem:[%s2 + $0x90] sm:$0xf]
    %v1469 = vld [vmem:[%s2 + $0x94] sm:$0xf]
    %v1470 = vld [vmem:[%s2 + $0x98] sm:$0xf]
    %v1471 = vld [vmem:[%s2 + $0x9c] sm:$0xf]
    %v1472 = vld [vmem:[%s2 + $0xa0] sm:$0xf]
    %v1473 = vld [vmem:[%s2 + $0xa4] sm:$0xf]
    %v1474 = vld [vmem:[%s2 + $0xa8] sm:$0xf]
    %v1475 = vld [vmem:[%s2 + $0xac] sm:$0xf]
    %v1476 = vld [vmem:[%s2 + $0xb0] sm:$0xf]
    %v1477 = vld [vmem:[%s2 + $0xb4] sm:$0xf]
    %v1478 = vld [vmem:[%s2 + $0xb8] sm:$0xf]
    %v1479 = vld [vmem:[%s2 + $0xbc] sm:$0xf]
    %v1480 = vld [vmem:[%s2 + $0xc0] sm:$0xf]
    %v1481 = vld [vmem:[%s2 + $0xc4] sm:$0xf]
    %v1482 = vld [vmem:[%s2 + $0xc8] sm:$0xf]
    %v1483 = vld [vmem:[%s2 + $0xcc] sm:$0xf]
    %v1484 = vld [vmem:[%s2 + $0xd0] sm:$0xf]
    %v1485 = vld [vmem:[%s2 + $0xd4] sm:$0xf]
    %v1486 = vld [vmem:[%s2 + $0xd8] sm:$0xf]
    %v1487 = vld [vmem:[%s2 + $0xdc] sm:$0xf]
    %v1488 = vld [vmem:[%s2 + $0xe0] sm:$0xf]
    %v1489 = vld [vmem:[%s2 + $0xe4] sm:$0xf]
    %v1490 = vld [vmem:[%s2 + $0xe8] sm:$0xf]
    %v1491 = vld [vmem:[%s2 + $0xec] sm:$0xf]
    %v1492 = vld [vmem:[%s2 + $0xf0] sm:$0xf]
    %v1493 = vld [vmem:[%s2 + $0xf4] sm:$0xf]
    %v1494 = vld [vmem:[%s2 + $0xf8] sm:$0xf]
    %v1495 = vld [vmem:[%s2 + $0xfc] sm:$0xf]
    %v1496 = vld [vmem:[%s3] sm:$0x1]
    %v1498 = vlaneseq
    %v1499 = vshrl.u32 %v1498, 7
    %v1500 = vsub.s32 0, %v1499
    %v1501 = vrot.slane %v1496, %v1500
    %v1567 = vunpack.c.l.b16 %v1432
    %v1568 = vunpack.c.l.b16 %v1433
    %v1569 = vunpack.c.l.b16 %v1434
    %v1570 = vunpack.c.l.b16 %v1435
    %v1571 = vunpack.c.l.b16 %v1436
    %v1572 = vunpack.c.l.b16 %v1437
    %v1573 = vunpack.c.l.b16 %v1438
    %v1574 = vunpack.c.l.b16 %v1439
    %v1575 = vunpack.c.l.b16 %v1440
    %v1576 = vunpack.c.l.b16 %v1441
    %v1577 = vunpack.c.l.b16 %v1442
    %v1578 = vunpack.c.l.b16 %v1443
    %v1579 = vunpack.c.l.b16 %v1444
    %v1580 = vunpack.c.l.b16 %v1445
    %v1581 = vunpack.c.l.b16 %v1446
    %v1582 = vunpack.c.l.b16 %v1447
    %v1583 = vunpack.c.l.b16 %v1448
    %v1584 = vunpack.c.l.b16 %v1449
    %v1585 = vunpack.c.l.b16 %v1450
    %v1586 = vunpack.c.l.b16 %v1451
    %v1587 = vunpack.c.l.b16 %v1452
    %v1588 = vunpack.c.l.b16 %v1453
    %v1589 = vunpack.c.l.b16 %v1454
    %v1590 = vunpack.c.l.b16 %v1455
    %v1591 = vunpack.c.l.b16 %v1456
    %v1592 = vunpack.c.l.b16 %v1457
    %v1593 = vunpack.c.l.b16 %v1458
    %v1594 = vunpack.c.l.b16 %v1459
    %v1595 = vunpack.c.l.b16 %v1460
    %v1596 = vunpack.c.l.b16 %v1461
    %v1597 = vunpack.c.l.b16 %v1462
    %v1598 = vunpack.c.l.b16 %v1463
    %v1599 = vunpack.c.l.b16 %v1464
    %v1600 = vunpack.c.l.b16 %v1465
    %v1601 = vunpack.c.l.b16 %v1466
    %v1602 = vunpack.c.l.b16 %v1467
    %v1603 = vunpack.c.l.b16 %v1468
    %v1604 = vunpack.c.l.b16 %v1469
    %v1605 = vunpack.c.l.b16 %v1470
    %v1606 = vunpack.c.l.b16 %v1471
    %v1607 = vunpack.c.l.b16 %v1472
    %v1608 = vunpack.c.l.b16 %v1473
    %v1609 = vunpack.c.l.b16 %v1474
    %v1610 = vunpack.c.l.b16 %v1475
    %v1611 = vunpack.c.l.b16 %v1476
    %v1612 = vunpack.c.l.b16 %v1477
    %v1613 = vunpack.c.l.b16 %v1478
    %v1614 = vunpack.c.l.b16 %v1479
    %v1615 = vunpack.c.l.b16 %v1480
    %v1616 = vunpack.c.l.b16 %v1481
    %v1617 = vunpack.c.l.b16 %v1482
    %v1618 = vunpack.c.l.b16 %v1483
    %v1619 = vunpack.c.l.b16 %v1484
    %v1620 = vunpack.c.l.b16 %v1485
    %v1621 = vunpack.c.l.b16 %v1486
    %v1622 = vunpack.c.l.b16 %v1487
    %v1623 = vunpack.c.l.b16 %v1488
    %v1624 = vunpack.c.l.b16 %v1489
    %v1625 = vunpack.c.l.b16 %v1490
    %v1626 = vunpack.c.l.b16 %v1491
    %v1627 = vunpack.c.l.b16 %v1492
    %v1628 = vunpack.c.l.b16 %v1493
    %v1629 = vunpack.c.l.b16 %v1494
    %v1630 = vunpack.c.l.b16 %v1495
    %v1631 = vpack.c.b16 %v1568, %v1567
    %v1632 = vpack.c.b16 %v1570, %v1569
    %v1633 = vpack.c.b16 %v1572, %v1571
    %v1634 = vpack.c.b16 %v1574, %v1573
    %v1635 = vpack.c.b16 %v1576, %v1575
    %v1636 = vpack.c.b16 %v1578, %v1577
    %v1637 = vpack.c.b16 %v1580, %v1579
    %v1638 = vpack.c.b16 %v1582, %v1581
    %v1639 = vpack.c.b16 %v1584, %v1583
    %v1640 = vpack.c.b16 %v1586, %v1585
    %v1641 = vpack.c.b16 %v1588, %v1587
    %v1642 = vpack.c.b16 %v1590, %v1589
    %v1643 = vpack.c.b16 %v1592, %v1591
    %v1644 = vpack.c.b16 %v1594, %v1593
    %v1645 = vpack.c.b16 %v1596, %v1595
    %v1646 = vpack.c.b16 %v1598, %v1597
    %v1647 = vpack.c.b16 %v1600, %v1599
    %v1648 = vpack.c.b16 %v1602, %v1601
    %v1649 = vpack.c.b16 %v1604, %v1603
    %v1650 = vpack.c.b16 %v1606, %v1605
    %v1651 = vpack.c.b16 %v1608, %v1607
    %v1652 = vpack.c.b16 %v1610, %v1609
    %v1653 = vpack.c.b16 %v1612, %v1611
    %v1654 = vpack.c.b16 %v1614, %v1613
    %v1655 = vpack.c.b16 %v1616, %v1615
    %v1656 = vpack.c.b16 %v1618, %v1617
    %v1657 = vpack.c.b16 %v1620, %v1619
    %v1658 = vpack.c.b16 %v1622, %v1621
    %v1659 = vpack.c.b16 %v1624, %v1623
    %v1660 = vpack.c.b16 %v1626, %v1625
    %v1661 = vpack.c.b16 %v1628, %v1627
    %v1662 = vpack.c.b16 %v1630, %v1629
    %1695 = vmatprep.subr.bf16.mxu0 0
    %1696 = vmatpush1.bf16.msra.mxu0 %v1638
    %1697 = vmatprep.subr.bf16.mxu0 0
    %1698 = vmatpush1.bf16.msra.mxu0 %v1637
    %1699 = vmatprep.subr.bf16.mxu0 0
    %1700 = vmatpush1.bf16.msra.mxu0 %v1636
    %1701 = vmatprep.subr.bf16.mxu0 0
    %1702 = vmatpush1.bf16.msra.mxu0 %v1635
    %1703 = vmatprep.subr.bf16.mxu0 0
    %1704 = vmatpush1.bf16.msra.mxu0 %v1634
    %1705 = vmatprep.subr.bf16.mxu0 0
    %1706 = vmatpush1.bf16.msra.mxu0 %v1633
    %1707 = vmatprep.subr.bf16.mxu0 0
    %1708 = vmatpush1.bf16.msra.mxu0 %v1632
    %1709 = vmatprep.subr.bf16.mxu0 0
    %1710 = vmatpush1.bf16.msra.mxu0 %v1631
    %1711 = vmatprep.subr.bf16.mxu0 0
    %1712 = vmatpush2.bf16.msra.mxu0 %v1646
    %1713 = vmatprep.subr.bf16.mxu0 0
    %1714 = vmatpush2.bf16.msra.mxu0 %v1645
    %1715 = vmatprep.subr.bf16.mxu0 0
    %1716 = vmatpush2.bf16.msra.mxu0 %v1644
    %1717 = vmatprep.subr.bf16.mxu0 0
    %1718 = vmatpush2.bf16.msra.mxu0 %v1643
    %1719 = vmatprep.subr.bf16.mxu0 0
    %1720 = vmatpush2.bf16.msra.mxu0 %v1642
    %1721 = vmatprep.subr.bf16.mxu0 0
    %1722 = vmatpush2.bf16.msra.mxu0 %v1641
    %1723 = vmatprep.subr.bf16.mxu0 0
    %1724 = vmatpush2.bf16.msra.mxu0 %v1640
    %1725 = vmatprep.subr.bf16.mxu0 0
    %1726 = vmatpush2.bf16.msra.mxu0 %v1639
    %1727 = vmatprep.mubr.bf16.mxu0 %v1413
    %1728 = vmatmul.mubr.bf16.gmra.mxu0 %v1412
    %v1729 = vpop.f32.mrf.mxu0
    %v1730 = vadd.f32 %v1501, %v1729
    %v1731 = vpop.f32.mrf.mxu0
    %v1732 = vpop.f32.mrf.mxu0
    %v1733 = vadd.f32 %v1501, %v1732
    %v1734 = vpop.f32.mrf.mxu0
    %1735 = vmatprep.mubr.bf16.mxu0 %v1417
    %1736 = vmatmul.mubr.bf16.gmra.mxu0 %v1416
    %v1737 = vpop.f32.mrf.mxu0
    %v1738 = vadd.f32 %v1501, %v1737
    %v1739 = vpop.f32.mrf.mxu0
    %v1740 = vpop.f32.mrf.mxu0
    %v1741 = vadd.f32 %v1501, %v1740
    %v1742 = vpop.f32.mrf.mxu0
    %1743 = vmatprep.mubr.bf16.mxu0 %v1421
    %1744 = vmatmul.mubr.bf16.gmra.mxu0 %v1420
    %v1745 = vpop.f32.mrf.mxu0
    %v1746 = vadd.f32 %v1501, %v1745
    %v1747 = vpop.f32.mrf.mxu0
    %v1748 = vpop.f32.mrf.mxu0
    %v1749 = vadd.f32 %v1501, %v1748
    %v1750 = vpop.f32.mrf.mxu0
    %1751 = vmatprep.mubr.bf16.mxu0 %v1425
    %1752 = vmatmul.mubr.bf16.gmra.mxu0 %v1424
    %v1753 = vpop.f32.mrf.mxu0
    %v1754 = vadd.f32 %v1501, %v1753
    %v1755 = vpop.f32.mrf.mxu0
    %v1756 = vpop.f32.mrf.mxu0
    %v1757 = vadd.f32 %v1501, %v1756
    %v1758 = vpop.f32.mrf.mxu0
    %1759 = vmatprep.mubr.bf16.mxu0 %v1429
    %1760 = vmatmul.mubr.bf16.gmra.mxu0 %v1428
    %v1761 = vpop.f32.mrf.mxu0
    %v1762 = vadd.f32 %v1501, %v1761
    %v1763 = vpop.f32.mrf.mxu0
    %v1764 = vpop.f32.mrf.mxu0
    %v1765 = vadd.f32 %v1501, %v1764
    %v1766 = vpop.f32.mrf.mxu0
    %1767 = vdwg.mxu0
    %1768 = vmatprep.subr.bf16.mxu0 0
    %1769 = vmatpush1.bf16.msra.mxu0 %v1654
    %1770 = vmatprep.subr.bf16.mxu0 0
    %1771 = vmatpush1.bf16.msra.mxu0 %v1653
    %1772 = vmatprep.subr.bf16.mxu0 0
    %1773 = vmatpush1.bf16.msra.mxu0 %v1652
    %1774 = vmatprep.subr.bf16.mxu0 0
    %1775 = vmatpush1.bf16.msra.mxu0 %v1651
    %1776 = vmatprep.subr.bf16.mxu0 0
    %1777 = vmatpush1.bf16.msra.mxu0 %v1650
    %1778 = vmatprep.subr.bf16.mxu0 0
    %1779 = vmatpush1.bf16.msra.mxu0 %v1649
    %1780 = vmatprep.subr.bf16.mxu0 0
    %1781 = vmatpush1.bf16.msra.mxu0 %v1648
    %1782 = vmatprep.subr.bf16.mxu0 0
    %1783 = vmatpush1.bf16.msra.mxu0 %v1647
    %1784 = vmatprep.subr.bf16.mxu0 0
    %1785 = vmatpush2.bf16.msra.mxu0 %v1662
    %1786 = vmatprep.subr.bf16.mxu0 0
    %1787 = vmatpush2.bf16.msra.mxu0 %v1661
    %1788 = vmatprep.subr.bf16.mxu0 0
    %1789 = vmatpush2.bf16.msra.mxu0 %v1660
    %1790 = vmatprep.subr.bf16.mxu0 0
    %1791 = vmatpush2.bf16.msra.mxu0 %v1659
    %1792 = vmatprep.subr.bf16.mxu0 0
    %1793 = vmatpush2.bf16.msra.mxu0 %v1658
    %1794 = vmatprep.subr.bf16.mxu0 0
    %1795 = vmatpush2.bf16.msra.mxu0 %v1657
    %1796 = vmatprep.subr.bf16.mxu0 0
    %1797 = vmatpush2.bf16.msra.mxu0 %v1656
    %1798 = vmatprep.subr.bf16.mxu0 0
    %1799 = vmatpush2.bf16.msra.mxu0 %v1655
    %1800 = vmatprep.mubr.bf16.mxu0 %v1415
    %1801 = vmatmul.mubr.bf16.gmra.mxu0 %v1414
    %v1802 = vpop.f32.mrf.mxu0
    %v1803 = vadd.f32 %v1730, %v1802
    %v1804 = vpop.f32.mrf.mxu0
    %v1805 = vpop.f32.mrf.mxu0
    %v1806 = vadd.f32 %v1733, %v1805
    %v1807 = vpop.f32.mrf.mxu0
    %1808 = vmatprep.mubr.bf16.mxu0 %v1419
    %1809 = vmatmul.mubr.bf16.gmra.mxu0 %v1418
    %v1810 = vpop.f32.mrf.mxu0
    %v1811 = vadd.f32 %v1738, %v1810
    %v1812 = vpop.f32.mrf.mxu0
    %v1813 = vpop.f32.mrf.mxu0
    %v1814 = vadd.f32 %v1741, %v1813
    %v1815 = vpop.f32.mrf.mxu0
    %1816 = vmatprep.mubr.bf16.mxu0 %v1423
    %1817 = vmatmul.mubr.bf16.gmra.mxu0 %v1422
    %v1818 = vpop.f32.mrf.mxu0
    %v1819 = vadd.f32 %v1746, %v1818
    %v1820 = vpop.f32.mrf.mxu0
    %v1821 = vpop.f32.mrf.mxu0
    %v1822 = vadd.f32 %v1749, %v1821
    %v1823 = vpop.f32.mrf.mxu0
    %1824 = vmatprep.mubr.bf16.mxu0 %v1427
    %1825 = vmatmul.mubr.bf16.gmra.mxu0 %v1426
    %v1826 = vpop.f32.mrf.mxu0
    %v1827 = vadd.f32 %v1754, %v1826
    %v1828 = vpop.f32.mrf.mxu0
    %v1829 = vpop.f32.mrf.mxu0
    %v1830 = vadd.f32 %v1757, %v1829
    %v1831 = vpop.f32.mrf.mxu0
    %1832 = vmatprep.mubr.bf16.mxu0 %v1431
    %1833 = vmatmul.mubr.bf16.gmra.mxu0 %v1430
    %v1834 = vpop.f32.mrf.mxu0
    %v1835 = vadd.f32 %v1762, %v1834
    %v1836 = vpop.f32.mrf.mxu0
    %v1837 = vpop.f32.mrf.mxu0
    %v1838 = vadd.f32 %v1765, %v1837
    %v1839 = vpop.f32.mrf.mxu0
    %1840 = vdwg.mxu0
    %v1841 = vadd.f32 %v1803, 0.0
    %vm1842 = vcmp.ge.f32.partialorder %v1841, 0.5
    %v1843 = vsel %vm1842, 1.0, 0.0
    %1844 = vst [vmem:[#allocation4] sm:$0xff] %v1843
    %v1845 = vsel %vm1842, 0.0, %v1841
    %v1846 = vmul.f32 %v1845, 0.5
    %v1847 = vadd.f32 %v1846, %v1806
    %vm1848 = vcmp.ge.f32.partialorder %v1847, 0.5
    %v1849 = vsel %vm1848, 1.0, 0.0
    %1850 = vst [vmem:[#allocation4 + $0x8] sm:$0xff] %v1849
    %v1851 = vsel %vm1848, 0.0, %v1847
    %v1852 = vmul.f32 %v1851, 0.5
    %v1853 = vadd.f32 %v1852, %v1811
    %vm1854 = vcmp.ge.f32.partialorder %v1853, 0.5
    %v1855 = vsel %vm1854, 1.0, 0.0
    %1856 = vst [vmem:[#allocation4 + $0x10] sm:$0xff] %v1855
    %v1857 = vsel %vm1854, 0.0, %v1853
    %v1858 = vmul.f32 %v1857, 0.5
    %v1859 = vadd.f32 %v1858, %v1814
    %vm1860 = vcmp.ge.f32.partialorder %v1859, 0.5
    %v1861 = vsel %vm1860, 1.0, 0.0
    %1862 = vst [vmem:[#allocation4 + $0x18] sm:$0xff] %v1861
    %v1863 = vsel %vm1860, 0.0, %v1859
    %v1864 = vmul.f32 %v1863, 0.5
    %v1865 = vadd.f32 %v1864, %v1819
    %vm1866 = vcmp.ge.f32.partialorder %v1865, 0.5
    %v1867 = vsel %vm1866, 1.0, 0.0
    %1868 = vst [vmem:[#allocation4 + $0x20] sm:$0xff] %v1867
    %v1869 = vsel %vm1866, 0.0, %v1865
    %v1870 = vmul.f32 %v1869, 0.5
    %v1871 = vadd.f32 %v1870, %v1822
    %vm1872 = vcmp.ge.f32.partialorder %v1871, 0.5
    %v1873 = vsel %vm1872, 1.0, 0.0
    %1874 = vst [vmem:[#allocation4 + $0x28] sm:$0xff] %v1873
    %v1875 = vsel %vm1872, 0.0, %v1871
    %v1876 = vmul.f32 %v1875, 0.5
    %v1877 = vadd.f32 %v1876, %v1827
    %vm1878 = vcmp.ge.f32.partialorder %v1877, 0.5
    %v1879 = vsel %vm1878, 1.0, 0.0
    %1880 = vst [vmem:[#allocation4 + $0x30] sm:$0xff] %v1879
    %v1881 = vsel %vm1878, 0.0, %v1877
    %v1882 = vmul.f32 %v1881, 0.5
    %v1883 = vadd.f32 %v1882, %v1830
    %vm1884 = vcmp.ge.f32.partialorder %v1883, 0.5
    %v1885 = vsel %vm1884, 1.0, 0.0
    %1886 = vst [vmem:[#allocation4 + $0x38] sm:$0xff] %v1885
    %v1887 = vsel %vm1884, 0.0, %v1883
    %v1888 = vmul.f32 %v1887, 0.5
    %v1889 = vadd.f32 %v1888, %v1835
    %vm1890 = vcmp.ge.f32.partialorder %v1889, 0.5
    %v1891 = vsel %vm1890, 1.0, 0.0
    %1892 = vst [vmem:[#allocation4 + $0x40] sm:$0xff] %v1891
    %v1893 = vsel %vm1890, 0.0, %v1889
    %v1894 = vmul.f32 %v1893, 0.5
    %v1895 = vadd.f32 %v1894, %v1838
    %vm1896 = vcmp.ge.f32.partialorder %v1895, 0.5
    %v1897 = vsel %vm1896, 1.0, 0.0
    %1898 = vst [vmem:[#allocation4 + $0x48] sm:$0xff] %v1897
    %v1899 = vld [vmem:[#allocation4] sm:$0xff]
    %v1900 = vld [vmem:[#allocation4 + $0x8] sm:$0xff]
    %v1901 = vld [vmem:[#allocation4 + $0x10] sm:$0xff]
    %v1902 = vld [vmem:[#allocation4 + $0x18] sm:$0xff]
    %v1903 = vld [vmem:[#allocation4 + $0x20] sm:$0xff]
    %v1904 = vld [vmem:[#allocation4 + $0x28] sm:$0xff]
    %v1905 = vld [vmem:[#allocation4 + $0x30] sm:$0xff]
    %v1906 = vld [vmem:[#allocation4 + $0x38] sm:$0xff]
    %v1907 = vld [vmem:[#allocation4 + $0x40] sm:$0xff]
    %v1908 = vld [vmem:[#allocation4 + $0x48] sm:$0xff]
    %v1909 = vpack.c.bf16 %v1900, %v1899
    %v1910 = vpack.c.bf16 %v1902, %v1901
    %v1911 = vpack.c.bf16 %v1904, %v1903
    %v1912 = vpack.c.bf16 %v1906, %v1905
    %v1913 = vpack.c.bf16 %v1908, %v1907
    %v1914 = vld [vmem:[#allocation7] sm:$0xf]
    %v1915 = vld [vmem:[#allocation7 + $0x4] sm:$0xf]
    %v1916 = vld [vmem:[#allocation7 + $0x8] sm:$0xf]
    %v1917 = vld [vmem:[#allocation7 + $0xc] sm:$0xf]
    %v1918 = vld [vmem:[#allocation7 + $0x10] sm:$0xf]
    %v1919 = vld [vmem:[#allocation7 + $0x14] sm:$0xf]
    %v1920 = vld [vmem:[#allocation7 + $0x18] sm:$0xf]
    %v1921 = vld [vmem:[#allocation7 + $0x1c] sm:$0xf]
    %v1922 = vld [vmem:[#allocation7 + $0x20] sm:$0xf]
    %v1923 = vld [vmem:[#allocation7 + $0x24] sm:$0xf]
    %v1924 = vld [vmem:[#allocation7 + $0x28] sm:$0xf]
    %v1925 = vld [vmem:[#allocation7 + $0x2c] sm:$0xf]
    %v1926 = vld [vmem:[#allocation7 + $0x30] sm:$0xf]
    %v1927 = vld [vmem:[#allocation7 + $0x34] sm:$0xf]
    %v1928 = vld [vmem:[#allocation7 + $0x38] sm:$0xf]
    %v1929 = vld [vmem:[#allocation7 + $0x3c] sm:$0xf]
    %v1930 = vld [vmem:[%s5] sm:$0x1]
    %v1932 = vlaneseq
    %v1933 = vshrl.u32 %v1932, 7
    %v1934 = vsub.s32 0, %v1933
    %v1935 = vrot.slane %v1930, %v1934
    %v1953 = vunpack.c.l.b16 %v1914
    %v1954 = vunpack.c.l.b16 %v1915
    %v1955 = vunpack.c.l.b16 %v1916
    %v1956 = vunpack.c.l.b16 %v1917
    %v1957 = vunpack.c.l.b16 %v1918
    %v1958 = vunpack.c.l.b16 %v1919
    %v1959 = vunpack.c.l.b16 %v1920
    %v1960 = vunpack.c.l.b16 %v1921
    %v1961 = vunpack.c.l.b16 %v1922
    %v1962 = vunpack.c.l.b16 %v1923
    %v1963 = vunpack.c.l.b16 %v1924
    %v1964 = vunpack.c.l.b16 %v1925
    %v1965 = vunpack.c.l.b16 %v1926
    %v1966 = vunpack.c.l.b16 %v1927
    %v1967 = vunpack.c.l.b16 %v1928
    %v1968 = vunpack.c.l.b16 %v1929
    %v1969 = vpack.c.b16 %v1954, %v1953
    %v1970 = vpack.c.b16 %v1956, %v1955
    %v1971 = vpack.c.b16 %v1958, %v1957
    %v1972 = vpack.c.b16 %v1960, %v1959
    %v1973 = vpack.c.b16 %v1962, %v1961
    %v1974 = vpack.c.b16 %v1964, %v1963
    %v1975 = vpack.c.b16 %v1966, %v1965
    %v1976 = vpack.c.b16 %v1968, %v1967
    %1985 = vmatprep.subr.bf16.mxu0 0
    %1986 = vmatpush1.bf16.msra.mxu0 %v1976
    %1987 = vmatprep.subr.bf16.mxu0 0
    %1988 = vmatpush1.bf16.msra.mxu0 %v1975
    %1989 = vmatprep.subr.bf16.mxu0 0
    %1990 = vmatpush1.bf16.msra.mxu0 %v1974
    %1991 = vmatprep.subr.bf16.mxu0 0
    %1992 = vmatpush1.bf16.msra.mxu0 %v1973
    %1993 = vmatprep.subr.bf16.mxu0 0
    %1994 = vmatpush1.bf16.msra.mxu0 %v1972
    %1995 = vmatprep.subr.bf16.mxu0 0
    %1996 = vmatpush1.bf16.msra.mxu0 %v1971
    %1997 = vmatprep.subr.bf16.mxu0 0
    %1998 = vmatpush1.bf16.msra.mxu0 %v1970
    %1999 = vmatprep.subr.bf16.mxu0 0
    %2000 = vmatpush1.bf16.msra.mxu0 %v1969
    %2001 = vmatprep.subr.bf16.mxu0 0
    %2002 = vmatpush2.bf16.msra.mxu0 0
    %2003 = vmatprep.subr.bf16.mxu0 0
    %2004 = vmatpush2.bf16.msra.mxu0 0
    %2005 = vmatprep.subr.bf16.mxu0 0
    %2006 = vmatpush2.bf16.msra.mxu0 0
    %2007 = vmatprep.subr.bf16.mxu0 0
    %2008 = vmatpush2.bf16.msra.mxu0 0
    %2009 = vmatprep.subr.bf16.mxu0 0
    %2010 = vmatpush2.bf16.msra.mxu0 0
    %2011 = vmatprep.subr.bf16.mxu0 0
    %2012 = vmatpush2.bf16.msra.mxu0 0
    %2013 = vmatprep.subr.bf16.mxu0 0
    %2014 = vmatpush2.bf16.msra.mxu0 0
    %2015 = vmatprep.subr.bf16.mxu0 0
    %2016 = vmatpush2.bf16.msra.mxu0 0
    %2017 = vmatprep.mubr.bf16.mxu0 0
    %2018 = vmatmul.mubr.bf16.gmra.mxu0 %v1909
    %v2019 = vpop.f32.mrf.mxu0
    %v2020 = vadd.f32 %v1935, %v2019
    %v2021 = vpop.f32.mrf.mxu0
    %v2022 = vpop.f32.mrf.mxu0
    %v2023 = vadd.f32 %v1935, %v2022
    %v2024 = vpop.f32.mrf.mxu0
    %2025 = vmatprep.mubr.bf16.mxu0 0
    %2026 = vmatmul.mubr.bf16.gmra.mxu0 %v1910
    %v2027 = vpop.f32.mrf.mxu0
    %v2028 = vadd.f32 %v1935, %v2027
    %v2029 = vpop.f32.mrf.mxu0
    %v2030 = vpop.f32.mrf.mxu0
    %v2031 = vadd.f32 %v1935, %v2030
    %v2032 = vpop.f32.mrf.mxu0
    %2033 = vmatprep.mubr.bf16.mxu0 0
    %2034 = vmatmul.mubr.bf16.gmra.mxu0 %v1911
    %v2035 = vpop.f32.mrf.mxu0
    %v2036 = vadd.f32 %v1935, %v2035
    %v2037 = vpop.f32.mrf.mxu0
    %v2038 = vpop.f32.mrf.mxu0
    %v2039 = vadd.f32 %v1935, %v2038
    %v2040 = vpop.f32.mrf.mxu0
    %2041 = vmatprep.mubr.bf16.mxu0 0
    %2042 = vmatmul.mubr.bf16.gmra.mxu0 %v1912
    %v2043 = vpop.f32.mrf.mxu0
    %v2044 = vadd.f32 %v1935, %v2043
    %v2045 = vpop.f32.mrf.mxu0
    %v2046 = vpop.f32.mrf.mxu0
    %v2047 = vadd.f32 %v1935, %v2046
    %v2048 = vpop.f32.mrf.mxu0
    %2049 = vmatprep.mubr.bf16.mxu0 0
    %2050 = vmatmul.mubr.bf16.gmra.mxu0 %v1913
    %v2051 = vpop.f32.mrf.mxu0
    %v2052 = vadd.f32 %v1935, %v2051
    %v2053 = vpop.f32.mrf.mxu0
    %v2054 = vpop.f32.mrf.mxu0
    %v2055 = vadd.f32 %v1935, %v2054
    %v2056 = vpop.f32.mrf.mxu0
    %2057 = vdwg.mxu0
    %v2058 = vadd.f32 %v2020, 0.0
    %vm2059 = vcmp.ge.f32.partialorder %v2058, 0.5
    %v2060 = vsel %vm2059, 1.0, 0.0
    %v2061 = vadd.f32 %v2060, 0.0
    %v2062 = vsel %vm2059, 0.0, %v2058
    %v2063 = vmul.f32 %v2062, 0.5
    %v2064 = vadd.f32 %v2063, %v2023
    %vm2065 = vcmp.ge.f32.partialorder %v2064, 0.5
    %v2066 = vsel %vm2065, 1.0, 0.0
    %v2067 = vadd.f32 %v2061, %v2066
    %v2068 = vsel %vm2065, 0.0, %v2064
    %v2069 = vmul.f32 %v2068, 0.5
    %v2070 = vadd.f32 %v2069, %v2028
    %vm2071 = vcmp.ge.f32.partialorder %v2070, 0.5
    %v2072 = vsel %vm2071, 1.0, 0.0
    %v2073 = vadd.f32 %v2067, %v2072
    %v2074 = vsel %vm2071, 0.0, %v2070
    %v2075 = vmul.f32 %v2074, 0.5
    %v2076 = vadd.f32 %v2075, %v2031
    %vm2077 = vcmp.ge.f32.partialorder %v2076, 0.5
    %v2078 = vsel %vm2077, 1.0, 0.0
    %v2079 = vadd.f32 %v2073, %v2078
    %v2080 = vsel %vm2077, 0.0, %v2076
    %v2081 = vmul.f32 %v2080, 0.5
    %v2082 = vadd.f32 %v2081, %v2036
    %vm2083 = vcmp.ge.f32.partialorder %v2082, 0.5
    %v2084 = vsel %vm2083, 1.0, 0.0
    %v2085 = vadd.f32 %v2079, %v2084
    %v2086 = vsel %vm2083, 0.0, %v2082
    %v2087 = vmul.f32 %v2086, 0.5
    %v2088 = vadd.f32 %v2087, %v2039
    %vm2089 = vcmp.ge.f32.partialorder %v2088, 0.5
    %v2090 = vsel %vm2089, 1.0, 0.0
    %v2091 = vadd.f32 %v2085, %v2090
    %v2092 = vsel %vm2089, 0.0, %v2088
    %v2093 = vmul.f32 %v2092, 0.5
    %v2094 = vadd.f32 %v2093, %v2044
    %vm2095 = vcmp.ge.f32.partialorder %v2094, 0.5
    %v2096 = vsel %vm2095, 1.0, 0.0
    %v2097 = vadd.f32 %v2091, %v2096
    %v2098 = vsel %vm2095, 0.0, %v2094
    %v2099 = vmul.f32 %v2098, 0.5
    %v2100 = vadd.f32 %v2099, %v2047
    %vm2101 = vcmp.ge.f32.partialorder %v2100, 0.5
    %v2102 = vsel %vm2101, 1.0, 0.0
    %v2103 = vadd.f32 %v2097, %v2102
    %v2104 = vsel %vm2101, 0.0, %v2100
    %v2105 = vmul.f32 %v2104, 0.5
    %v2106 = vadd.f32 %v2105, %v2052
    %vm2107 = vcmp.ge.f32.partialorder %v2106, 0.5
    %v2108 = vsel %vm2107, 1.0, 0.0
    %v2109 = vadd.f32 %v2103, %v2108
    %v2110 = vsel %vm2107, 0.0, %v2106
    %v2111 = vmul.f32 %v2110, 0.5
    %v2112 = vadd.f32 %v2111, %v2055
    %vm2113 = vcmp.ge.f32.partialorder %v2112, 0.5
    %v2114 = vsel %vm2113, 1.0, 0.0
    %v2115 = vadd.f32 %v2109, %v2114
    %v2116 = vmul.f32 %v2115, 0.1
    %2117 = vst [vmem:[%s6] sm:$0xff] %v2116
    // Predicated region
    $region34: #{spike_bcrnet_s.1} parent=1 // pred_check
      _
    $region35: #{spike_bcrnet_s.1} parent=1 // pred_check_branch
      %2119 = sbr.rel (0) target = $region37
    $region36: #{spike_bcrnet_s.1} parent=1 // pred_region
      _
    $region37: #{spike_bcrnet_s.1} parent=1 // pred_fallthru
      _
    // Predicated region
    $region38: #{spike_bcrnet_s.1} parent=1 // pred_check
      _
    $region39: #{spike_bcrnet_s.1} parent=1 // pred_check_branch
      %2121 = sbr.rel (0) target = $region41
    $region40: #{spike_bcrnet_s.1} parent=1 // pred_region
      _
    $region41: #{spike_bcrnet_s.1} parent=1 // pred_fallthru
      _
    %2122 = vsyncpa [#allocation6], 1
    %2123 = vsyncpa [#allocation8], 1

</llo_original>
